<compile_context>
chip_gen: v5e
topology: v5e:2x2
jax: 0.10.0
libtpu: 0.0.40
codegen_flags: <defaults>
</compile_context>

<pallas_src>
import functools
import math

import jax
import jax.numpy as jnp
from jax.experimental import pallas as pl
from jax.experimental.pallas import tpu as pltpu


# --------------------------------------------------------------------------
# helpers
# --------------------------------------------------------------------------
def _pick_tile(dim, candidates):
    for c in candidates:
        if c <= dim and dim % c == 0:
            return c
    return dim


@functools.lru_cache(maxsize=1)
def _vmem_limit_bytes():
    # v5e/v6e: 128 MiB physical VMEM; v7x: 64 MiB.  Use ~3/4 of physical,
    # capped at 96 MiB (=> 48 MiB on v7x).
    try:
        cap = pltpu.get_tpu_info().vmem_capacity_bytes
    except Exception:
        cap = 64 * 1024 * 1024
    return int(min(cap * 3 // 4, 96 * 1024 * 1024))


def _heads_per_group(n_head, n_kv_head, head_dim):
    """Smallest query-head group with lane-dense (multiple-of-128 or full) blocks."""
    rep = n_head // n_kv_head
    for g in range(rep, n_head + 1):
        if n_head % g or g % rep:
            continue
        gkv = g // rep
        q_ok = (g * head_dim) % 128 == 0 or g == n_head
        k_ok = (gkv * head_dim) % 128 == 0 or gkv == n_kv_head
        if q_ok and k_ok:
            return g
    return n_head


# --------------------------------------------------------------------------
# tiled matmul kernel (bf16 operands, f32 accumulate)
# --------------------------------------------------------------------------
def _matmul_kernel(x_ref, w_ref, o_ref, acc_ref):
    @pl.when(pl.program_id(2) == 0)
    def _():
        acc_ref[...] = jnp.zeros(acc_ref.shape, acc_ref.dtype)

    acc_ref[...] += jnp.dot(x_ref[...], w_ref[...],
                            preferred_element_type=jnp.float32)

    @pl.when(pl.program_id(2) == pl.num_programs(2) - 1)
    def _():
        o_ref[...] = acc_ref[...].astype(o_ref.dtype)


def pallas_matmul(x, w, *, out_dtype=jnp.float32, tm=None, tn=None, tk=None):
    """x: (M, K), w: (K, N) -> (M, N) out_dtype. Tiled, double-buffered."""
    M, K = x.shape
    K2, N = w.shape
    assert K == K2
    tm = tm or _pick_tile(M, (512, 256, 128, 64, 32, 16, 8))
    tn = tn or _pick_tile(N, (512, 384, 256, 128))
    tk = tk or _pick_tile(K, (512, 256, 128))
    grid = (M // tm, N // tn, K // tk)
    return pl.pallas_call(
        _matmul_kernel,
        out_shape=jax.ShapeDtypeStruct((M, N), out_dtype),
        grid_spec=pltpu.PrefetchScalarGridSpec(
            num_scalar_prefetch=0,
            grid=grid,
            in_specs=[
                pl.BlockSpec((tm, tk), lambda i, j, k: (i, k)),
                pl.BlockSpec((tk, tn), lambda i, j, k: (k, j)),
            ],
            out_specs=pl.BlockSpec((tm, tn), lambda i, j, k: (i, j)),
            scratch_shapes=[pltpu.VMEM((tm, tn), jnp.float32)],
        ),
        compiler_params=pltpu.CompilerParams(
            dimension_semantics=("parallel", "parallel", "arbitrary"),
            vmem_limit_bytes=_vmem_limit_bytes(),
        ),
    )(x, w)


# --------------------------------------------------------------------------
# flash attention kernel (pre-rotated / pre-scaled Q,K; online softmax;
# head group indexed via BlockSpec -> no transposes, lane-dense output)
# --------------------------------------------------------------------------
def _flash_attention_kernel(q_ref, k_ref, v_ref, mask_ref, o_ref,
                            m_sc, l_sc, acc_sc, *, heads, rep, head_dim):
    ki = pl.program_id(3)

    @pl.when(ki == 0)
    def _():
        m_sc[...] = jnp.full(m_sc.shape, -jnp.inf, m_sc.dtype)
        l_sc[...] = jnp.zeros(l_sc.shape, l_sc.dtype)
        acc_sc[...] = jnp.zeros(acc_sc.shape, acc_sc.dtype)

    q_all = q_ref[0]                               # (tq, heads*D)  bf16, RoPE + scale applied
    k_all = k_ref[0]                               # (tk, heads_kv*D) bf16, RoPE applied
    v_all = v_ref[0]                               # (tk, heads_kv*D) bf16
    mask = mask_ref[...].astype(jnp.float32)       # (tq, tk) additive, shared by the whole group

    for h in range(heads):                         # static, small (heads*D == 128 typically)
        hkv = h // rep
        q_h = jax.lax.slice_in_dim(q_all, h * head_dim, (h + 1) * head_dim, axis=1)
        k_h = jax.lax.slice_in_dim(k_all, hkv * head_dim, (hkv + 1) * head_dim, axis=1)
        v_h = jax.lax.slice_in_dim(v_all, hkv * head_dim, (hkv + 1) * head_dim, axis=1)

        s = jax.lax.dot_general(q_h, k_h, (((1,), (1,)), ((), ())),
                                preferred_element_type=jnp.float32)      # (tq, tk)
        s = s + mask

        m_prev = m_sc[h]                                                  # (tq, 1)
        m_new = jnp.maximum(m_prev, jnp.max(s, axis=-1, keepdims=True))
        alpha = jnp.exp(m_prev - m_new)
        p = jnp.exp(s - m_new)
        l_sc[h] = alpha * l_sc[h] + jnp.sum(p, axis=-1, keepdims=True)
        acc_sc[h] = alpha * acc_sc[h] + jnp.dot(p.astype(jnp.bfloat16), v_h,
                                                preferred_element_type=jnp.float32)
        m_sc[h] = m_new

    @pl.when(ki == pl.num_programs(3) - 1)
    def _():
        outs = [acc_sc[h] * pl.reciprocal(l_sc[h], approx=True) for h in range(heads)]
        o_ref[0] = jnp.concatenate(outs, axis=-1).astype(o_ref.dtype)    # lane-dense store


def pallas_flash_attention(q, k, v, mask, *, n_head, n_local_heads, head_dim,
                           tq=None, tk=None):
    """q: (B, S, H*D) bf16 (RoPE + scale applied); k,v: (B, Sk, Hkv*D) bf16;
    mask: (S, Sk) additive bf16.  Returns (B, S, H*D) bf16."""
    B, S, _ = q.shape
    Sk = k.shape[1]
    rep = n_head // n_local_heads
    G = _heads_per_group(n_head, n_local_heads, head_dim)   # query heads per block
    Gkv = G // rep
    n_groups = n_head // G
    qw = G * head_dim
    kw = Gkv * head_dim

    tq = tq or _pick_tile(S, (256, 128, 64, 32, 16, 8))
    tk = tk or _pick_tile(Sk, (256, 128, 64, 32, 16, 8))
    grid = (B, n_groups, S // tq, Sk // tk)

    kernel = functools.partial(_flash_attention_kernel,
                               heads=G, rep=rep, head_dim=head_dim)

    return pl.pallas_call(
        kernel,
        out_shape=jax.ShapeDtypeStruct((B, S, n_head * head_dim), q.dtype),
        grid_spec=pltpu.PrefetchScalarGridSpec(
            num_scalar_prefetch=0,
            grid=grid,
            in_specs=[
                pl.BlockSpec((1, tq, qw), lambda b, g, qi, ki: (b, qi, g)),
                pl.BlockSpec((1, tk, kw), lambda b, g, qi, ki: (b, ki, g)),
                pl.BlockSpec((1, tk, kw), lambda b, g, qi, ki: (b, ki, g)),
                pl.BlockSpec((tq, tk), lambda b, g, qi, ki: (qi, ki)),
            ],
            out_specs=pl.BlockSpec((1, tq, qw), lambda b, g, qi, ki: (b, qi, g)),
            scratch_shapes=[
                pltpu.VMEM((G, tq, 1), jnp.float32),          # running max
                pltpu.VMEM((G, tq, 1), jnp.float32),          # running denom
                pltpu.VMEM((G, tq, head_dim), jnp.float32),   # output accumulator
            ],
        ),
        compiler_params=pltpu.CompilerParams(
            dimension_semantics=("parallel", "parallel", "parallel", "arbitrary"),
            vmem_limit_bytes=_vmem_limit_bytes(),
        ),
    )(q, k, v, mask)


# --------------------------------------------------------------------------
# one-time weight preprocessing (hoisted out of the per-call path)
# --------------------------------------------------------------------------
def prepare_attention_weights(wqkv, wo, *, n_head, n_local_heads, head_dim):
    """Fold the 1/sqrt(head_dim) softmax scale into the q rows (RoPE is a rotation,
    so scaling before rotation == after), transpose to (K, N) and cast to bf16."""
    q_size = n_head * head_dim
    scale = 1.0 / math.sqrt(head_dim)
    wq = wqkv[:q_size] * scale
    wkv = wqkv[q_size:]
    wqkv_t = jnp.concatenate([wq, wkv], axis=0).T.astype(jnp.bfloat16)
    wo_t = wo.T.astype(jnp.bfloat16)
    return wqkv_t, wo_t


# --------------------------------------------------------------------------
# forward wrapper
# --------------------------------------------------------------------------
def _apply_rope(t, cos, sin):
    """t: (B, S, H, D) interleaved-pair layout -> (B, S, H*D), rotated (f32 math)."""
    B, S, H, D = t.shape
    tf = t.astype(jnp.float32).reshape(B, S, H, D // 2, 2)
    c = cos.reshape(1, S, 1, D // 2)
    s_ = sin.reshape(1, S, 1, D // 2)
    o0 = tf[..., 0] * c - tf[..., 1] * s_
    o1 = tf[..., 1] * c + tf[..., 0] * s_
    return jnp.stack([o0, o1], axis=-1).reshape(B, S, H * D)


def attention_forward(x, freqs_cis, mask, wqkv_t, wo_t, *,
                      n_head, n_local_heads, head_dim):
    B, S, dim = x.shape
    assert n_head % n_local_heads == 0
    q_size = n_head * head_dim
    kv_size = n_local_heads * head_dim

    # 1) fused QKV projection (bf16 MXU operands, f32 accumulate, bf16 out)
    x2d = x.reshape(B * S, dim).astype(jnp.bfloat16)
    qkv = pallas_matmul(x2d, wqkv_t, out_dtype=jnp.bfloat16)      # (B*S, total)

    q = qkv[:, :q_size].reshape(B, S, n_head, head_dim)
    k = qkv[:, q_size:q_size + kv_size].reshape(B, S, n_local_heads, head_dim)
    v = qkv[:, q_size + kv_size:].reshape(B, S, n_local_heads * head_dim)

    # 2) RoPE once, outside the flash kernel (scale already folded into wq rows).
    #    Q/K/V stay in (B, S, heads*head_dim) layout -> no transposes around the kernel.
    cos = freqs_cis[..., 0].astype(jnp.float32)                   # (S, head_dim//2)
    sin = freqs_cis[..., 1].astype(jnp.float32)
    q_rot = _apply_rope(q, cos, sin).astype(jnp.bfloat16)         # (B, S, H*D)
    k_rot = _apply_rope(k, cos, sin).astype(jnp.bfloat16)         # (B, S, Hkv*D)

    # 3) flash attention (head group via BlockSpec, additive bf16 mask, GQA via index_map)
    y = pallas_flash_attention(q_rot, k_rot, v, mask.astype(jnp.bfloat16),
                               n_head=n_head, n_local_heads=n_local_heads,
                               head_dim=head_dim)                 # (B, S, H*D) bf16

    # 4) output projection -> f32 at the module boundary
    out = pallas_matmul(y.reshape(B * S, q_size), wo_t, out_dtype=jnp.float32)
    return out.reshape(B, S, dim)


# --------------------------------------------------------------------------
# pure-JAX reference mirroring the PyTorch forward exactly (f32, HIGHEST)
# --------------------------------------------------------------------------
def reference_forward(x, freqs_cis, mask, wqkv, wo, *,
                      n_head, n_local_heads, head_dim):
    B, S, dim = x.shape
    kv_size = n_local_heads * head_dim   # torch splits q with kv_size (requires q_size==kv_size)
    hi = jax.lax.Precision.HIGHEST
    qkv = jnp.einsum("bsd,td->bst", x, wqkv, precision=hi)
    q = qkv[..., :kv_size].reshape(B, S, n_head, head_dim)
    k = qkv[..., kv_size:2 * kv_size].reshape(B, S, n_local_heads, head_dim)
    v = qkv[..., 2 * kv_size:].reshape(B, S, n_local_heads, head_dim)

    def rope(t):
        tsh = t.reshape(*t.shape[:-1], -1, 2)
        fc = freqs_cis.reshape(1, S, 1, head_dim // 2, 2)
        o0 = tsh[..., 0] * fc[..., 0] - tsh[..., 1] * fc[..., 1]
        o1 = tsh[..., 1] * fc[..., 0] + tsh[..., 0] * fc[..., 1]
        return jnp.stack([o0, o1], axis=-1).reshape(t.shape)

    q, k = rope(q), rope(k)
    q, k, v = (t.transpose(0, 2, 1, 3) for t in (q, k, v))
    rep = n_head // n_local_heads
    if rep > 1:
        k = jnp.repeat(k, rep, axis=1)
        v = jnp.repeat(v, rep, axis=1)
    scale = 1.0 / math.sqrt(head_dim)
    scores = jnp.einsum("bhqd,bhkd->bhqk", q, k, precision=hi) * scale
    scores = scores + mask[None, None]
    probs = jax.nn.softmax(scores, axis=-1)
    y = jnp.einsum("bhqk,bhkd->bhqd", probs, v, precision=hi)
    y = y.transpose(0, 2, 1, 3).reshape(B, S, n_head * head_dim)
    return jnp.einsum("bst,dt->bsd", y, wo, precision=hi)


# --------------------------------------------------------------------------
if __name__ == "__main__":
    # small config consistent with ModelArgs (self-attention path: n_local == n_head,
    # since the module's split([kv_size]*3) requires q_size == kv_size)
    B, S = 2, 8
    n_head = 4
    n_local_heads = 4
    head_dim = 32
    dim = n_head * head_dim                                     # 128
    total_head_dim = (n_head + 2 * n_local_heads) * head_dim    # 384

    key = jax.random.PRNGKey(0)
    kx, kw1, kw2 = jax.random.split(key, 3)
    x = jax.random.normal(kx, (B, S, dim), dtype=jnp.float32)
    wqkv = 0.02 * jax.random.normal(kw1, (total_head_dim, dim), dtype=jnp.float32)
    wo = 0.02 * jax.random.normal(kw2, (dim, n_head * head_dim), dtype=jnp.float32)

    # rotary table: (S, head_dim//2, 2) storing [cos, sin]
    half = head_dim // 2
    inv_freq = 1.0 / (10000.0 ** (jnp.arange(half, dtype=jnp.float32) * 2.0 / head_dim))
    angles = jnp.outer(jnp.arange(S, dtype=jnp.float32), inv_freq)
    freqs_cis = jnp.stack([jnp.cos(angles), jnp.sin(angles)], axis=-1)

    # additive float attention mask (causal) — matches SDPA float-mask semantics
    causal = jnp.tril(jnp.ones((S, S), dtype=bool))
    mask = jnp.where(causal, 0.0, -1e9).astype(jnp.float32)

    # one-time weight preprocessing (scale folding, transpose, bf16 cast)
    wqkv_t, wo_t = prepare_attention_weights(
        wqkv, wo, n_head=n_head, n_local_heads=n_local_heads, head_dim=head_dim)

    fwd = jax.jit(functools.partial(
        attention_forward, n_head=n_head, n_local_heads=n_local_heads,
        head_dim=head_dim))
    out = jax.block_until_ready(fwd(x, freqs_cis, mask, wqkv_t, wo_t))

    ref = reference_forward(x, freqs_cis, mask, wqkv, wo,
                            n_head=n_head, n_local_heads=n_local_heads,
                            head_dim=head_dim)
    assert out.shape == (B, S, dim)
    max_err = float(jnp.max(jnp.abs(out - ref)))
    assert jnp.allclose(out, ref, atol=5e-3, rtol=5e-2), max_err
    print("KERNEL_OK")
</pallas_src>

<mosaic_0001>
module attributes {stable_mosaic.version = 11 : i64} {
  func.func @_matmul_kernel(%arg0: i32, %arg1: i32, %arg2: i32, %arg3: memref<16x128xbf16, #tpu.memory_space<vmem>>, %arg4: memref<128x384xbf16, #tpu.memory_space<vmem>>, %arg5: memref<16x384xbf16, #tpu.memory_space<vmem>>, %arg6: memref<16x384xf32, #tpu.memory_space<vmem>>) attributes {dimension_semantics = [#tpu.dimension_semantics<parallel>, #tpu.dimension_semantics<parallel>, #tpu.dimension_semantics<arbitrary>], iteration_bounds = array<i64: 1, 1, 1>, scalar_prefetch = 0 : i64, scratch_operands = 1 : i64, tpu.core_type = #tpu.core_type<tc>, window_params = [{transform_indices = @transform_0, window_bounds = array<i64: 16, 128>}, {transform_indices = @transform_1, window_bounds = array<i64: 128, 384>}, {transform_indices = @transform_2, window_bounds = array<i64: 16, 384>}]} {
    %c0_i32 = arith.constant 0 : i32
    %0 = arith.cmpi eq, %arg2, %c0_i32 : i32
    %1 = arith.extui %0 : i1 to i32
    %c0_i32_0 = arith.constant 0 : i32
    %2 = arith.cmpi ne, %1, %c0_i32_0 : i32
    scf.if %2 {
      %cst_10 = arith.constant 0.000000e+00 : f32
      %12 = vector.broadcast %cst_10 : f32 to vector<16x384xf32>
      %c0_11 = arith.constant 0 : index
      %c0_12 = arith.constant 0 : index
      %13 = vector.load %arg6[%c0_11, %c0_12] : memref<16x384xf32, #tpu.memory_space<vmem>>, vector<16x384xf32>
      tpu.vector_store %arg6[%c0_11, %c0_12], %12 {strides = array<i32>} : memref<16x384xf32, #tpu.memory_space<vmem>>, vector<16x384xf32>,
    } else {
    }
    %c0 = arith.constant 0 : index
    %c0_1 = arith.constant 0 : index
    %3 = vector.load %arg6[%c0, %c0_1] : memref<16x384xf32, #tpu.memory_space<vmem>>, vector<16x384xf32>
    %c0_2 = arith.constant 0 : index
    %c0_3 = arith.constant 0 : index
    %4 = vector.load %arg3[%c0_2, %c0_3] : memref<16x128xbf16, #tpu.memory_space<vmem>>, vector<16x128xbf16>
    %c0_4 = arith.constant 0 : index
    %c0_5 = arith.constant 0 : index
    %5 = vector.load %arg4[%c0_4, %c0_5] : memref<128x384xbf16, #tpu.memory_space<vmem>>, vector<128x384xbf16>
    %cst = arith.constant dense<0.000000e+00> : vector<16x384xf32>
    %6 = tpu.matmul %4, %5, %cst {dimension_numbers = #tpu.dot_dimension_numbers<[1], [0], [0], [1], [0, 0, 1, 1], [], []>} : vector<16x128xbf16>, vector<128x384xbf16>, vector<16x384xf32> -> vector<16x384xf32>
    %7 = arith.addf %3, %6 : vector<16x384xf32>
    %c0_6 = arith.constant 0 : index
    %c0_7 = arith.constant 0 : index
    %8 = vector.load %arg6[%c0_6, %c0_7] : memref<16x384xf32, #tpu.memory_space<vmem>>, vector<16x384xf32>
    tpu.vector_store %arg6[%c0_6, %c0_7], %7 {strides = array<i32>} : memref<16x384xf32, #tpu.memory_space<vmem>>, vector<16x384xf32>,
    %c0_i32_8 = arith.constant 0 : i32
    %9 = arith.cmpi eq, %arg2, %c0_i32_8 : i32
    %10 = arith.extui %9 : i1 to i32
    %c0_i32_9 = arith.constant 0 : i32
    %11 = arith.cmpi ne, %10, %c0_i32_9 : i32
    scf.if %11 {
      %c0_10 = arith.constant 0 : index
      %c0_11 = arith.constant 0 : index
      %12 = vector.load %arg6[%c0_10, %c0_11] : memref<16x384xf32, #tpu.memory_space<vmem>>, vector<16x384xf32>
      %13 = arith.truncf %12 : vector<16x384xf32> to vector<16x384xbf16>
      %c0_12 = arith.constant 0 : index
      %c0_13 = arith.constant 0 : index
      %14 = vector.load %arg5[%c0_12, %c0_13] : memref<16x384xbf16, #tpu.memory_space<vmem>>, vector<16x384xbf16>
      tpu.vector_store %arg5[%c0_12, %c0_13], %13 {strides = array<i32>} : memref<16x384xbf16, #tpu.memory_space<vmem>>, vector<16x384xbf16>,
    } else {
    }
    return
  }
  func.func @transform_0(%arg0: i32, %arg1: i32, %arg2: i32) -> (i32, i32) {
    %c0_i32 = arith.constant 0 : i32
    return %arg0, %arg2 : i32, i32
  }
  func.func @transform_1(%arg0: i32, %arg1: i32, %arg2: i32) -> (i32, i32) {
    %c0_i32 = arith.constant 0 : i32
    return %arg2, %arg1 : i32, i32
  }
  func.func @transform_2(%arg0: i32, %arg1: i32, %arg2: i32) -> (i32, i32) {
    %c0_i32 = arith.constant 0 : i32
    return %arg0, %arg1 : i32, i32
  }
}

module attributes {stable_mosaic.version = 11 : i64} {
  func.func @_flash_attention_kernel(%arg0: i32, %arg1: i32, %arg2: i32, %arg3: i32, %arg4: memref<1x8x128xbf16, #tpu.memory_space<vmem>>, %arg5: memref<1x8x128xbf16, #tpu.memory_space<vmem>>, %arg6: memref<1x8x128xbf16, #tpu.memory_space<vmem>>, %arg7: memref<8x8xbf16, #tpu.memory_space<vmem>>, %arg8: memref<1x8x128xbf16, #tpu.memory_space<vmem>>, %arg9: memref<4x8x1xf32, #tpu.memory_space<vmem>>, %arg10: memref<4x8x1xf32, #tpu.memory_space<vmem>>, %arg11: memref<4x8x32xf32, #tpu.memory_space<vmem>>) attributes {dimension_semantics = [#tpu.dimension_semantics<parallel>, #tpu.dimension_semantics<parallel>, #tpu.dimension_semantics<parallel>, #tpu.dimension_semantics<arbitrary>], iteration_bounds = array<i64: 2, 1, 1, 1>, scalar_prefetch = 0 : i64, scratch_operands = 3 : i64, tpu.core_type = #tpu.core_type<tc>, window_params = [{transform_indices = @transform_0, window_bounds = array<i64: 1, 8, 128>}, {transform_indices = @transform_1, window_bounds = array<i64: 1, 8, 128>}, {transform_indices = @transform_2, window_bounds = array<i64: 1, 8, 128>}, {transform_indices = @transform_3, window_bounds = array<i64: 8, 8>}, {transform_indices = @transform_4, window_bounds = array<i64: 1, 8, 128>}]} {
    %c0_i32 = arith.constant 0 : i32
    %0 = arith.cmpi eq, %arg3, %c0_i32 : i32
    %1 = arith.extui %0 : i1 to i32
    %c0_i32_0 = arith.constant 0 : i32
    %2 = arith.cmpi ne, %1, %c0_i32_0 : i32
    scf.if %2 {
      %cst_97 = arith.constant 0xFF800000 : f32
      %162 = vector.broadcast %cst_97 : f32 to vector<4x8x1xf32>
      %c0_98 = arith.constant 0 : index
      %c0_99 = arith.constant 0 : index
      %c0_100 = arith.constant 0 : index
      %163 = vector.load %arg9[%c0_98, %c0_99, %c0_100] : memref<4x8x1xf32, #tpu.memory_space<vmem>>, vector<4x8x1xf32>
      tpu.vector_store %arg9[%c0_98, %c0_99, %c0_100], %162 {strides = array<i32>} : memref<4x8x1xf32, #tpu.memory_space<vmem>>, vector<4x8x1xf32>,
      %cst_101 = arith.constant 0.000000e+00 : f32
      %164 = vector.broadcast %cst_101 : f32 to vector<4x8x1xf32>
      %c0_102 = arith.constant 0 : index
      %c0_103 = arith.constant 0 : index
      %c0_104 = arith.constant 0 : index
      %165 = vector.load %arg10[%c0_102, %c0_103, %c0_104] : memref<4x8x1xf32, #tpu.memory_space<vmem>>, vector<4x8x1xf32>
      tpu.vector_store %arg10[%c0_102, %c0_103, %c0_104], %164 {strides = array<i32>} : memref<4x8x1xf32, #tpu.memory_space<vmem>>, vector<4x8x1xf32>,
      %cst_105 = arith.constant 0.000000e+00 : f32
      %166 = vector.broadcast %cst_105 : f32 to vector<4x8x32xf32>
      %c0_106 = arith.constant 0 : index
      %c0_107 = arith.constant 0 : index
      %c0_108 = arith.constant 0 : index
      %167 = vector.load %arg11[%c0_106, %c0_107, %c0_108] : memref<4x8x32xf32, #tpu.memory_space<vmem>>, vector<4x8x32xf32>
      tpu.vector_store %arg11[%c0_106, %c0_107, %c0_108], %166 {strides = array<i32>} : memref<4x8x32xf32, #tpu.memory_space<vmem>>, vector<4x8x32xf32>,
    } else {
    }
    %c0 = arith.constant 0 : index
    %c0_1 = arith.constant 0 : index
    %c0_2 = arith.constant 0 : index
    %3 = vector.load %arg4[%c0, %c0_1, %c0_2] : memref<1x8x128xbf16, #tpu.memory_space<vmem>>, vector<1x8x128xbf16>
    %4 = vector.shape_cast %3 : vector<1x8x128xbf16> to vector<8x128xbf16>
    %c0_3 = arith.constant 0 : index
    %c0_4 = arith.constant 0 : index
    %c0_5 = arith.constant 0 : index
    %5 = vector.load %arg5[%c0_3, %c0_4, %c0_5] : memref<1x8x128xbf16, #tpu.memory_space<vmem>>, vector<1x8x128xbf16>
    %6 = vector.shape_cast %5 : vector<1x8x128xbf16> to vector<8x128xbf16>
    %c0_6 = arith.constant 0 : index
    %c0_7 = arith.constant 0 : index
    %c0_8 = arith.constant 0 : index
    %7 = vector.load %arg6[%c0_6, %c0_7, %c0_8] : memref<1x8x128xbf16, #tpu.memory_space<vmem>>, vector<1x8x128xbf16>
    %8 = vector.shape_cast %7 : vector<1x8x128xbf16> to vector<8x128xbf16>
    %c0_9 = arith.constant 0 : index
    %c0_10 = arith.constant 0 : index
    %9 = vector.load %arg7[%c0_9, %c0_10] : memref<8x8xbf16, #tpu.memory_space<vmem>>, vector<8x8xbf16>
    %10 = arith.extf %9 : vector<8x8xbf16> to vector<8x8xf32>
    %11 = vector.extract_strided_slice %4 {offsets = [0, 0], sizes = [8, 32], strides = [1, 1]} : vector<8x128xbf16> to vector<8x32xbf16>
    %12 = vector.extract_strided_slice %6 {offsets = [0, 0], sizes = [8, 32], strides = [1, 1]} : vector<8x128xbf16> to vector<8x32xbf16>
    %13 = vector.extract_strided_slice %8 {offsets = [0, 0], sizes = [8, 32], strides = [1, 1]} : vector<8x128xbf16> to vector<8x32xbf16>
    %cst = arith.constant dense<0.000000e+00> : vector<8x8xf32>
    %14 = tpu.matmul %11, %12, %cst {dimension_numbers = #tpu.dot_dimension_numbers<[1], [1], [0], [0], [0, 0, 1, 0], [], []>} : vector<8x32xbf16>, vector<8x32xbf16>, vector<8x8xf32> -> vector<8x8xf32>
    %15 = arith.addf %14, %10 : vector<8x8xf32>
    %c0_11 = arith.constant 0 : index
    %c0_12 = arith.constant 0 : index
    %c0_13 = arith.constant 0 : index
    %16 = vector.load %arg9[%c0_11, %c0_12, %c0_13] : memref<4x8x1xf32, #tpu.memory_space<vmem>>, vector<1x8x1xf32>
    %17 = vector.shape_cast %16 : vector<1x8x1xf32> to vector<8x1xf32>
    %cst_14 = arith.constant dense<0xFF800000> : vector<8xf32>
    %18 = vector.multi_reduction <maximumf>, %15, %cst_14 [1] : vector<8x8xf32> to vector<8xf32>
    %19 = vector.shape_cast %18 : vector<8xf32> to vector<8x1xf32>
    %20 = arith.maximumf %17, %19 : vector<8x1xf32>
    %21 = arith.subf %17, %20 : vector<8x1xf32>
    %22 = math.exp %21 : vector<8x1xf32>
    %23 = vector.broadcast %20 : vector<8x1xf32> to vector<8x8xf32>
    %24 = arith.subf %15, %23 : vector<8x8xf32>
    %25 = math.exp %24 : vector<8x8xf32>
    %c0_15 = arith.constant 0 : index
    %c0_16 = arith.constant 0 : index
    %c0_17 = arith.constant 0 : index
    %26 = vector.load %arg10[%c0_15, %c0_16, %c0_17] : memref<4x8x1xf32, #tpu.memory_space<vmem>>, vector<1x8x1xf32>
    %27 = vector.shape_cast %26 : vector<1x8x1xf32> to vector<8x1xf32>
    %28 = arith.mulf %22, %27 : vector<8x1xf32>
    %cst_18 = arith.constant dense<0.000000e+00> : vector<8xf32>
    %29 = vector.multi_reduction <add>, %25, %cst_18 [1] : vector<8x8xf32> to vector<8xf32>
    %30 = vector.shape_cast %29 : vector<8xf32> to vector<8x1xf32>
    %31 = arith.addf %28, %30 : vector<8x1xf32>
    %c0_19 = arith.constant 0 : index
    %c0_20 = arith.constant 0 : index
    %c0_21 = arith.constant 0 : index
    %32 = vector.load %arg10[%c0_19, %c0_20, %c0_21] : memref<4x8x1xf32, #tpu.memory_space<vmem>>, vector<1x8x1xf32>
    %33 = vector.shape_cast %32 : vector<1x8x1xf32> to vector<8x1xf32>
    %34 = vector.shape_cast %31 : vector<8x1xf32> to vector<1x8x1xf32>
    tpu.vector_store %arg10[%c0_19, %c0_20, %c0_21], %34 {strides = array<i32>} : memref<4x8x1xf32, #tpu.memory_space<vmem>>, vector<1x8x1xf32>,
    %c0_22 = arith.constant 0 : index
    %c0_23 = arith.constant 0 : index
    %c0_24 = arith.constant 0 : index
    %35 = vector.load %arg11[%c0_22, %c0_23, %c0_24] : memref<4x8x32xf32, #tpu.memory_space<vmem>>, vector<1x8x32xf32>
    %36 = vector.shape_cast %35 : vector<1x8x32xf32> to vector<8x32xf32>
    %37 = vector.broadcast %22 : vector<8x1xf32> to vector<8x32xf32>
    %38 = arith.mulf %37, %36 : vector<8x32xf32>
    %39 = arith.truncf %25 : vector<8x8xf32> to vector<8x8xbf16>
    %cst_25 = arith.constant dense<0.000000e+00> : vector<8x32xf32>
    %40 = tpu.matmul %39, %13, %cst_25 {dimension_numbers = #tpu.dot_dimension_numbers<[1], [0], [0], [1], [0, 0, 1, 1], [], []>} : vector<8x8xbf16>, vector<8x32xbf16>, vector<8x32xf32> -> vector<8x32xf32>
    %41 = arith.addf %38, %40 : vector<8x32xf32>
    %c0_26 = arith.constant 0 : index
    %c0_27 = arith.constant 0 : index
    %c0_28 = arith.constant 0 : index
    %42 = vector.load %arg11[%c0_26, %c0_27, %c0_28] : memref<4x8x32xf32, #tpu.memory_space<vmem>>, vector<1x8x32xf32>
    %43 = vector.shape_cast %42 : vector<1x8x32xf32> to vector<8x32xf32>
    %44 = vector.shape_cast %41 : vector<8x32xf32> to vector<1x8x32xf32>
    tpu.vector_store %arg11[%c0_26, %c0_27, %c0_28], %44 {strides = array<i32>} : memref<4x8x32xf32, #tpu.memory_space<vmem>>, vector<1x8x32xf32>,
    %c0_29 = arith.constant 0 : index
    %c0_30 = arith.constant 0 : index
    %c0_31 = arith.constant 0 : index
    %45 = vector.load %arg9[%c0_29, %c0_30, %c0_31] : memref<4x8x1xf32, #tpu.memory_space<vmem>>, vector<1x8x1xf32>
    %46 = vector.shape_cast %45 : vector<1x8x1xf32> to vector<8x1xf32>
    %47 = vector.shape_cast %20 : vector<8x1xf32> to vector<1x8x1xf32>
    tpu.vector_store %arg9[%c0_29, %c0_30, %c0_31], %47 {strides = array<i32>} : memref<4x8x1xf32, #tpu.memory_space<vmem>>, vector<1x8x1xf32>,
    %48 = vector.extract_strided_slice %4 {offsets = [0, 32], sizes = [8, 32], strides = [1, 1]} : vector<8x128xbf16> to vector<8x32xbf16>
    %49 = vector.extract_strided_slice %6 {offsets = [0, 32], sizes = [8, 32], strides = [1, 1]} : vector<8x128xbf16> to vector<8x32xbf16>
    %50 = vector.extract_strided_slice %8 {offsets = [0, 32], sizes = [8, 32], strides = [1, 1]} : vector<8x128xbf16> to vector<8x32xbf16>
    %cst_32 = arith.constant dense<0.000000e+00> : vector<8x8xf32>
    %51 = tpu.matmul %48, %49, %cst_32 {dimension_numbers = #tpu.dot_dimension_numbers<[1], [1], [0], [0], [0, 0, 1, 0], [], []>} : vector<8x32xbf16>, vector<8x32xbf16>, vector<8x8xf32> -> vector<8x8xf32>
    %52 = arith.addf %51, %10 : vector<8x8xf32>
    %c1 = arith.constant 1 : index
    %c0_33 = arith.constant 0 : index
    %c0_34 = arith.constant 0 : index
    %53 = vector.load %arg9[%c1, %c0_33, %c0_34] : memref<4x8x1xf32, #tpu.memory_space<vmem>>, vector<1x8x1xf32>
    %54 = vector.shape_cast %53 : vector<1x8x1xf32> to vector<8x1xf32>
    %cst_35 = arith.constant dense<0xFF800000> : vector<8xf32>
    %55 = vector.multi_reduction <maximumf>, %52, %cst_35 [1] : vector<8x8xf32> to vector<8xf32>
    %56 = vector.shape_cast %55 : vector<8xf32> to vector<8x1xf32>
    %57 = arith.maximumf %54, %56 : vector<8x1xf32>
    %58 = arith.subf %54, %57 : vector<8x1xf32>
    %59 = math.exp %58 : vector<8x1xf32>
    %60 = vector.broadcast %57 : vector<8x1xf32> to vector<8x8xf32>
    %61 = arith.subf %52, %60 : vector<8x8xf32>
    %62 = math.exp %61 : vector<8x8xf32>
    %c1_36 = arith.constant 1 : index
    %c0_37 = arith.constant 0 : index
    %c0_38 = arith.constant 0 : index
    %63 = vector.load %arg10[%c1_36, %c0_37, %c0_38] : memref<4x8x1xf32, #tpu.memory_space<vmem>>, vector<1x8x1xf32>
    %64 = vector.shape_cast %63 : vector<1x8x1xf32> to vector<8x1xf32>
    %65 = arith.mulf %59, %64 : vector<8x1xf32>
    %cst_39 = arith.constant dense<0.000000e+00> : vector<8xf32>
    %66 = vector.multi_reduction <add>, %62, %cst_39 [1] : vector<8x8xf32> to vector<8xf32>
    %67 = vector.shape_cast %66 : vector<8xf32> to vector<8x1xf32>
    %68 = arith.addf %65, %67 : vector<8x1xf32>
    %c1_40 = arith.constant 1 : index
    %c0_41 = arith.constant 0 : index
    %c0_42 = arith.constant 0 : index
    %69 = vector.load %arg10[%c1_40, %c0_41, %c0_42] : memref<4x8x1xf32, #tpu.memory_space<vmem>>, vector<1x8x1xf32>
    %70 = vector.shape_cast %69 : vector<1x8x1xf32> to vector<8x1xf32>
    %71 = vector.shape_cast %68 : vector<8x1xf32> to vector<1x8x1xf32>
    tpu.vector_store %arg10[%c1_40, %c0_41, %c0_42], %71 {strides = array<i32>} : memref<4x8x1xf32, #tpu.memory_space<vmem>>, vector<1x8x1xf32>,
    %c1_43 = arith.constant 1 : index
    %c0_44 = arith.constant 0 : index
    %c0_45 = arith.constant 0 : index
    %72 = vector.load %arg11[%c1_43, %c0_44, %c0_45] : memref<4x8x32xf32, #tpu.memory_space<vmem>>, vector<1x8x32xf32>
    %73 = vector.shape_cast %72 : vector<1x8x32xf32> to vector<8x32xf32>
    %74 = vector.broadcast %59 : vector<8x1xf32> to vector<8x32xf32>
    %75 = arith.mulf %74, %73 : vector<8x32xf32>
    %76 = arith.truncf %62 : vector<8x8xf32> to vector<8x8xbf16>
    %cst_46 = arith.constant dense<0.000000e+00> : vector<8x32xf32>
    %77 = tpu.matmul %76, %50, %cst_46 {dimension_numbers = #tpu.dot_dimension_numbers<[1], [0], [0], [1], [0, 0, 1, 1], [], []>} : vector<8x8xbf16>, vector<8x32xbf16>, vector<8x32xf32> -> vector<8x32xf32>
    %78 = arith.addf %75, %77 : vector<8x32xf32>
    %c1_47 = arith.constant 1 : index
    %c0_48 = arith.constant 0 : index
    %c0_49 = arith.constant 0 : index
    %79 = vector.load %arg11[%c1_47, %c0_48, %c0_49] : memref<4x8x32xf32, #tpu.memory_space<vmem>>, vector<1x8x32xf32>
    %80 = vector.shape_cast %79 : vector<1x8x32xf32> to vector<8x32xf32>
    %81 = vector.shape_cast %78 : vector<8x32xf32> to vector<1x8x32xf32>
    tpu.vector_store %arg11[%c1_47, %c0_48, %c0_49], %81 {strides = array<i32>} : memref<4x8x32xf32, #tpu.memory_space<vmem>>, vector<1x8x32xf32>,
    %c1_50 = arith.constant 1 : index
    %c0_51 = arith.constant 0 : index
    %c0_52 = arith.constant 0 : index
    %82 = vector.load %arg9[%c1_50, %c0_51, %c0_52] : memref<4x8x1xf32, #tpu.memory_space<vmem>>, vector<1x8x1xf32>
    %83 = vector.shape_cast %82 : vector<1x8x1xf32> to vector<8x1xf32>
    %84 = vector.shape_cast %57 : vector<8x1xf32> to vector<1x8x1xf32>
    tpu.vector_store %arg9[%c1_50, %c0_51, %c0_52], %84 {strides = array<i32>} : memref<4x8x1xf32, #tpu.memory_space<vmem>>, vector<1x8x1xf32>,
    %85 = vector.extract_strided_slice %4 {offsets = [0, 64], sizes = [8, 32], strides = [1, 1]} : vector<8x128xbf16> to vector<8x32xbf16>
    %86 = vector.extract_strided_slice %6 {offsets = [0, 64], sizes = [8, 32], strides = [1, 1]} : vector<8x128xbf16> to vector<8x32xbf16>
    %87 = vector.extract_strided_slice %8 {offsets = [0, 64], sizes = [8, 32], strides = [1, 1]} : vector<8x128xbf16> to vector<8x32xbf16>
    %cst_53 = arith.constant dense<0.000000e+00> : vector<8x8xf32>
    %88 = tpu.matmul %85, %86, %cst_53 {dimension_numbers = #tpu.dot_dimension_numbers<[1], [1], [0], [0], [0, 0, 1, 0], [], []>} : vector<8x32xbf16>, vector<8x32xbf16>, vector<8x8xf32> -> vector<8x8xf32>
    %89 = arith.addf %88, %10 : vector<8x8xf32>
    %c2 = arith.constant 2 : index
    %c0_54 = arith.constant 0 : index
    %c0_55 = arith.constant 0 : index
    %90 = vector.load %arg9[%c2, %c0_54, %c0_55] : memref<4x8x1xf32, #tpu.memory_space<vmem>>, vector<1x8x1xf32>
    %91 = vector.shape_cast %90 : vector<1x8x1xf32> to vector<8x1xf32>
    %cst_56 = arith.constant dense<0xFF800000> : vector<8xf32>
    %92 = vector.multi_reduction <maximumf>, %89, %cst_56 [1] : vector<8x8xf32> to vector<8xf32>
    %93 = vector.shape_cast %92 : vector<8xf32> to vector<8x1xf32>
    %94 = arith.maximumf %91, %93 : vector<8x1xf32>
    %95 = arith.subf %91, %94 : vector<8x1xf32>
    %96 = math.exp %95 : vector<8x1xf32>
    %97 = vector.broadcast %94 : vector<8x1xf32> to vector<8x8xf32>
    %98 = arith.subf %89, %97 : vector<8x8xf32>
    %99 = math.exp %98 : vector<8x8xf32>
    %c2_57 = arith.constant 2 : index
    %c0_58 = arith.constant 0 : index
    %c0_59 = arith.constant 0 : index
    %100 = vector.load %arg10[%c2_57, %c0_58, %c0_59] : memref<4x8x1xf32, #tpu.memory_space<vmem>>, vector<1x8x1xf32>
    %101 = vector.shape_cast %100 : vector<1x8x1xf32> to vector<8x1xf32>
    %102 = arith.mulf %96, %101 : vector<8x1xf32>
    %cst_60 = arith.constant dense<0.000000e+00> : vector<8xf32>
    %103 = vector.multi_reduction <add>, %99, %cst_60 [1] : vector<8x8xf32> to vector<8xf32>
    %104 = vector.shape_cast %103 : vector<8xf32> to vector<8x1xf32>
    %105 = arith.addf %102, %104 : vector<8x1xf32>
    %c2_61 = arith.constant 2 : index
    %c0_62 = arith.constant 0 : index
    %c0_63 = arith.constant 0 : index
    %106 = vector.load %arg10[%c2_61, %c0_62, %c0_63] : memref<4x8x1xf32, #tpu.memory_space<vmem>>, vector<1x8x1xf32>
    %107 = vector.shape_cast %106 : vector<1x8x1xf32> to vector<8x1xf32>
    %108 = vector.shape_cast %105 : vector<8x1xf32> to vector<1x8x1xf32>
    tpu.vector_store %arg10[%c2_61, %c0_62, %c0_63], %108 {strides = array<i32>} : memref<4x8x1xf32, #tpu.memory_space<vmem>>, vector<1x8x1xf32>,
    %c2_64 = arith.constant 2 : index
    %c0_65 = arith.constant 0 : index
    %c0_66 = arith.constant 0 : index
    %109 = vector.load %arg11[%c2_64, %c0_65, %c0_66] : memref<4x8x32xf32, #tpu.memory_space<vmem>>, vector<1x8x32xf32>
    %110 = vector.shape_cast %109 : vector<1x8x32xf32> to vector<8x32xf32>
    %111 = vector.broadcast %96 : vector<8x1xf32> to vector<8x32xf32>
    %112 = arith.mulf %111, %110 : vector<8x32xf32>
    %113 = arith.truncf %99 : vector<8x8xf32> to vector<8x8xbf16>
    %cst_67 = arith.constant dense<0.000000e+00> : vector<8x32xf32>
    %114 = tpu.matmul %113, %87, %cst_67 {dimension_numbers = #tpu.dot_dimension_numbers<[1], [0], [0], [1], [0, 0, 1, 1], [], []>} : vector<8x8xbf16>, vector<8x32xbf16>, vector<8x32xf32> -> vector<8x32xf32>
    %115 = arith.addf %112, %114 : vector<8x32xf32>
    %c2_68 = arith.constant 2 : index
    %c0_69 = arith.constant 0 : index
    %c0_70 = arith.constant 0 : index
    %116 = vector.load %arg11[%c2_68, %c0_69, %c0_70] : memref<4x8x32xf32, #tpu.memory_space<vmem>>, vector<1x8x32xf32>
    %117 = vector.shape_cast %116 : vector<1x8x32xf32> to vector<8x32xf32>
    %118 = vector.shape_cast %115 : vector<8x32xf32> to vector<1x8x32xf32>
    tpu.vector_store %arg11[%c2_68, %c0_69, %c0_70], %118 {strides = array<i32>} : memref<4x8x32xf32, #tpu.memory_space<vmem>>, vector<1x8x32xf32>,
    %c2_71 = arith.constant 2 : index
    %c0_72 = arith.constant 0 : index
    %c0_73 = arith.constant 0 : index
    %119 = vector.load %arg9[%c2_71, %c0_72, %c0_73] : memref<4x8x1xf32, #tpu.memory_space<vmem>>, vector<1x8x1xf32>
    %120 = vector.shape_cast %119 : vector<1x8x1xf32> to vector<8x1xf32>
    %121 = vector.shape_cast %94 : vector<8x1xf32> to vector<1x8x1xf32>
    tpu.vector_store %arg9[%c2_71, %c0_72, %c0_73], %121 {strides = array<i32>} : memref<4x8x1xf32, #tpu.memory_space<vmem>>, vector<1x8x1xf32>,
    %122 = vector.extract_strided_slice %4 {offsets = [0, 96], sizes = [8, 32], strides = [1, 1]} : vector<8x128xbf16> to vector<8x32xbf16>
    %123 = vector.extract_strided_slice %6 {offsets = [0, 96], sizes = [8, 32], strides = [1, 1]} : vector<8x128xbf16> to vector<8x32xbf16>
    %124 = vector.extract_strided_slice %8 {offsets = [0, 96], sizes = [8, 32], strides = [1, 1]} : vector<8x128xbf16> to vector<8x32xbf16>
    %cst_74 = arith.constant dense<0.000000e+00> : vector<8x8xf32>
    %125 = tpu.matmul %122, %123, %cst_74 {dimension_numbers = #tpu.dot_dimension_numbers<[1], [1], [0], [0], [0, 0, 1, 0], [], []>} : vector<8x32xbf16>, vector<8x32xbf16>, vector<8x8xf32> -> vector<8x8xf32>
    %126 = arith.addf %125, %10 : vector<8x8xf32>
    %c3 = arith.constant 3 : index
    %c0_75 = arith.constant 0 : index
    %c0_76 = arith.constant 0 : index
    %127 = vector.load %arg9[%c3, %c0_75, %c0_76] : memref<4x8x1xf32, #tpu.memory_space<vmem>>, vector<1x8x1xf32>
    %128 = vector.shape_cast %127 : vector<1x8x1xf32> to vector<8x1xf32>
    %cst_77 = arith.constant dense<0xFF800000> : vector<8xf32>
    %129 = vector.multi_reduction <maximumf>, %126, %cst_77 [1] : vector<8x8xf32> to vector<8xf32>
    %130 = vector.shape_cast %129 : vector<8xf32> to vector<8x1xf32>
    %131 = arith.maximumf %128, %130 : vector<8x1xf32>
    %132 = arith.subf %128, %131 : vector<8x1xf32>
    %133 = math.exp %132 : vector<8x1xf32>
    %134 = vector.broadcast %131 : vector<8x1xf32> to vector<8x8xf32>
    %135 = arith.subf %126, %134 : vector<8x8xf32>
    %136 = math.exp %135 : vector<8x8xf32>
    %c3_78 = arith.constant 3 : index
    %c0_79 = arith.constant 0 : index
    %c0_80 = arith.constant 0 : index
    %137 = vector.load %arg10[%c3_78, %c0_79, %c0_80] : memref<4x8x1xf32, #tpu.memory_space<vmem>>, vector<1x8x1xf32>
    %138 = vector.shape_cast %137 : vector<1x8x1xf32> to vector<8x1xf32>
    %139 = arith.mulf %133, %138 : vector<8x1xf32>
    %cst_81 = arith.constant dense<0.000000e+00> : vector<8xf32>
    %140 = vector.multi_reduction <add>, %136, %cst_81 [1] : vector<8x8xf32> to vector<8xf32>
    %141 = vector.shape_cast %140 : vector<8xf32> to vector<8x1xf32>
    %142 = arith.addf %139, %141 : vector<8x1xf32>
    %c3_82 = arith.constant 3 : index
    %c0_83 = arith.constant 0 : index
    %c0_84 = arith.constant 0 : index
    %143 = vector.load %arg10[%c3_82, %c0_83, %c0_84] : memref<4x8x1xf32, #tpu.memory_space<vmem>>, vector<1x8x1xf32>
    %144 = vector.shape_cast %143 : vector<1x8x1xf32> to vector<8x1xf32>
    %145 = vector.shape_cast %142 : vector<8x1xf32> to vector<1x8x1xf32>
    tpu.vector_store %arg10[%c3_82, %c0_83, %c0_84], %145 {strides = array<i32>} : memref<4x8x1xf32, #tpu.memory_space<vmem>>, vector<1x8x1xf32>,
    %c3_85 = arith.constant 3 : index
    %c0_86 = arith.constant 0 : index
    %c0_87 = arith.constant 0 : index
    %146 = vector.load %arg11[%c3_85, %c0_86, %c0_87] : memref<4x8x32xf32, #tpu.memory_space<vmem>>, vector<1x8x32xf32>
    %147 = vector.shape_cast %146 : vector<1x8x32xf32> to vector<8x32xf32>
    %148 = vector.broadcast %133 : vector<8x1xf32> to vector<8x32xf32>
    %149 = arith.mulf %148, %147 : vector<8x32xf32>
    %150 = arith.truncf %136 : vector<8x8xf32> to vector<8x8xbf16>
    %cst_88 = arith.constant dense<0.000000e+00> : vector<8x32xf32>
    %151 = tpu.matmul %150, %124, %cst_88 {dimension_numbers = #tpu.dot_dimension_numbers<[1], [0], [0], [1], [0, 0, 1, 1], [], []>} : vector<8x8xbf16>, vector<8x32xbf16>, vector<8x32xf32> -> vector<8x32xf32>
    %152 = arith.addf %149, %151 : vector<8x32xf32>
    %c3_89 = arith.constant 3 : index
    %c0_90 = arith.constant 0 : index
    %c0_91 = arith.constant 0 : index
    %153 = vector.load %arg11[%c3_89, %c0_90, %c0_91] : memref<4x8x32xf32, #tpu.memory_space<vmem>>, vector<1x8x32xf32>
    %154 = vector.shape_cast %153 : vector<1x8x32xf32> to vector<8x32xf32>
    %155 = vector.shape_cast %152 : vector<8x32xf32> to vector<1x8x32xf32>
    tpu.vector_store %arg11[%c3_89, %c0_90, %c0_91], %155 {strides = array<i32>} : memref<4x8x32xf32, #tpu.memory_space<vmem>>, vector<1x8x32xf32>,
    %c3_92 = arith.constant 3 : index
    %c0_93 = arith.constant 0 : index
    %c0_94 = arith.constant 0 : index
    %156 = vector.load %arg9[%c3_92, %c0_93, %c0_94] : memref<4x8x1xf32, #tpu.memory_space<vmem>>, vector<1x8x1xf32>
    %157 = vector.shape_cast %156 : vector<1x8x1xf32> to vector<8x1xf32>
    %158 = vector.shape_cast %131 : vector<8x1xf32> to vector<1x8x1xf32>
    tpu.vector_store %arg9[%c3_92, %c0_93, %c0_94], %158 {strides = array<i32>} : memref<4x8x1xf32, #tpu.memory_space<vmem>>, vector<1x8x1xf32>,
    %c0_i32_95 = arith.constant 0 : i32
    %159 = arith.cmpi eq, %arg3, %c0_i32_95 : i32
    %160 = arith.extui %159 : i1 to i32
    %c0_i32_96 = arith.constant 0 : i32
    %161 = arith.cmpi ne, %160, %c0_i32_96 : i32
    scf.if %161 {
      %c0_97 = arith.constant 0 : index
      %c0_98 = arith.constant 0 : index
      %c0_99 = arith.constant 0 : index
      %162 = vector.load %arg11[%c0_97, %c0_98, %c0_99] : memref<4x8x32xf32, #tpu.memory_space<vmem>>, vector<1x8x32xf32>
      %163 = vector.shape_cast %162 : vector<1x8x32xf32> to vector<8x32xf32>
      %c0_100 = arith.constant 0 : index
      %c0_101 = arith.constant 0 : index
      %c0_102 = arith.constant 0 : index
      %164 = vector.load %arg10[%c0_100, %c0_101, %c0_102] : memref<4x8x1xf32, #tpu.memory_space<vmem>>, vector<1x8x1xf32>
      %165 = vector.shape_cast %164 : vector<1x8x1xf32> to vector<8x1xf32>
      %166 = tpu.reciprocal %165 {approx = true} : vector<8x1xf32> -> vector<8x1xf32>
      %167 = vector.broadcast %166 : vector<8x1xf32> to vector<8x32xf32>
      %168 = arith.mulf %163, %167 : vector<8x32xf32>
      %c1_103 = arith.constant 1 : index
      %c0_104 = arith.constant 0 : index
      %c0_105 = arith.constant 0 : index
      %169 = vector.load %arg11[%c1_103, %c0_104, %c0_105] : memref<4x8x32xf32, #tpu.memory_space<vmem>>, vector<1x8x32xf32>
      %170 = vector.shape_cast %169 : vector<1x8x32xf32> to vector<8x32xf32>
      %c1_106 = arith.constant 1 : index
      %c0_107 = arith.constant 0 : index
      %c0_108 = arith.constant 0 : index
      %171 = vector.load %arg10[%c1_106, %c0_107, %c0_108] : memref<4x8x1xf32, #tpu.memory_space<vmem>>, vector<1x8x1xf32>
      %172 = vector.shape_cast %171 : vector<1x8x1xf32> to vector<8x1xf32>
      %173 = tpu.reciprocal %172 {approx = true} : vector<8x1xf32> -> vector<8x1xf32>
      %174 = vector.broadcast %173 : vector<8x1xf32> to vector<8x32xf32>
      %175 = arith.mulf %170, %174 : vector<8x32xf32>
      %c2_109 = arith.constant 2 : index
      %c0_110 = arith.constant 0 : index
      %c0_111 = arith.constant 0 : index
      %176 = vector.load %arg11[%c2_109, %c0_110, %c0_111] : memref<4x8x32xf32, #tpu.memory_space<vmem>>, vector<1x8x32xf32>
      %177 = vector.shape_cast %176 : vector<1x8x32xf32> to vector<8x32xf32>
      %c2_112 = arith.constant 2 : index
      %c0_113 = arith.constant 0 : index
      %c0_114 = arith.constant 0 : index
      %178 = vector.load %arg10[%c2_112, %c0_113, %c0_114] : memref<4x8x1xf32, #tpu.memory_space<vmem>>, vector<1x8x1xf32>
      %179 = vector.shape_cast %178 : vector<1x8x1xf32> to vector<8x1xf32>
      %180 = tpu.reciprocal %179 {approx = true} : vector<8x1xf32> -> vector<8x1xf32>
      %181 = vector.broadcast %180 : vector<8x1xf32> to vector<8x32xf32>
      %182 = arith.mulf %177, %181 : vector<8x32xf32>
      %c3_115 = arith.constant 3 : index
      %c0_116 = arith.constant 0 : index
      %c0_117 = arith.constant 0 : index
      %183 = vector.load %arg11[%c3_115, %c0_116, %c0_117] : memref<4x8x32xf32, #tpu.memory_space<vmem>>, vector<1x8x32xf32>
      %184 = vector.shape_cast %183 : vector<1x8x32xf32> to vector<8x32xf32>
      %c3_118 = arith.constant 3 : index
      %c0_119 = arith.constant 0 : index
      %c0_120 = arith.constant 0 : index
      %185 = vector.load %arg10[%c3_118, %c0_119, %c0_120] : memref<4x8x1xf32, #tpu.memory_space<vmem>>, vector<1x8x1xf32>
      %186 = vector.shape_cast %185 : vector<1x8x1xf32> to vector<8x1xf32>
      %187 = tpu.reciprocal %186 {approx = true} : vector<8x1xf32> -> vector<8x1xf32>
      %188 = vector.broadcast %187 : vector<8x1xf32> to vector<8x32xf32>
      %189 = arith.mulf %184, %188 : vector<8x32xf32>
      %190 = tpu.concatenate %168, %175, %182, %189 in 1 : vector<8x32xf32>, vector<8x32xf32>, vector<8x32xf32>, vector<8x32xf32> -> vector<8x128xf32>
      %191 = arith.truncf %190 : vector<8x128xf32> to vector<8x128xbf16>
      %c0_121 = arith.constant 0 : index
      %c0_122 = arith.constant 0 : index
      %c0_123 = arith.constant 0 : index
      %192 = vector.load %arg8[%c0_121, %c0_122, %c0_123] : memref<1x8x128xbf16, #tpu.memory_space<vmem>>, vector<1x8x128xbf16>
      %193 = vector.shape_cast %192 : vector<1x8x128xbf16> to vector<8x128xbf16>
      %194 = vector.shape_cast %191 : vector<8x128xbf16> to vector<1x8x128xbf16>
      tpu.vector_store %arg8[%c0_121, %c0_122, %c0_123], %194 {strides = array<i32>} : memref<1x8x128xbf16, #tpu.memory_space<vmem>>, vector<1x8x128xbf16>,
    } else {
    }
    return
  }
  func.func @transform_0(%arg0: i32, %arg1: i32, %arg2: i32, %arg3: i32) -> (i32, i32, i32) {
    %c0_i32 = arith.constant 0 : i32
    return %arg0, %arg2, %arg1 : i32, i32, i32
  }
  func.func @transform_1(%arg0: i32, %arg1: i32, %arg2: i32, %arg3: i32) -> (i32, i32, i32) {
    %c0_i32 = arith.constant 0 : i32
    return %arg0, %arg3, %arg1 : i32, i32, i32
  }
  func.func @transform_2(%arg0: i32, %arg1: i32, %arg2: i32, %arg3: i32) -> (i32, i32, i32) {
    %c0_i32 = arith.constant 0 : i32
    return %arg0, %arg3, %arg1 : i32, i32, i32
  }
  func.func @transform_3(%arg0: i32, %arg1: i32, %arg2: i32, %arg3: i32) -> (i32, i32) {
    %c0_i32 = arith.constant 0 : i32
    return %arg2, %arg3 : i32, i32
  }
  func.func @transform_4(%arg0: i32, %arg1: i32, %arg2: i32, %arg3: i32) -> (i32, i32, i32) {
    %c0_i32 = arith.constant 0 : i32
    return %arg0, %arg2, %arg1 : i32, i32, i32
  }
}

module attributes {stable_mosaic.version = 11 : i64} {
  func.func @_matmul_kernel(%arg0: i32, %arg1: i32, %arg2: i32, %arg3: memref<16x128xbf16, #tpu.memory_space<vmem>>, %arg4: memref<128x128xbf16, #tpu.memory_space<vmem>>, %arg5: memref<16x128xf32, #tpu.memory_space<vmem>>, %arg6: memref<16x128xf32, #tpu.memory_space<vmem>>) attributes {dimension_semantics = [#tpu.dimension_semantics<parallel>, #tpu.dimension_semantics<parallel>, #tpu.dimension_semantics<arbitrary>], iteration_bounds = array<i64: 1, 1, 1>, scalar_prefetch = 0 : i64, scratch_operands = 1 : i64, tpu.core_type = #tpu.core_type<tc>, window_params = [{transform_indices = @transform_0, window_bounds = array<i64: 16, 128>}, {transform_indices = @transform_1, window_bounds = array<i64: 128, 128>}, {transform_indices = @transform_2, window_bounds = array<i64: 16, 128>}]} {
    %c0_i32 = arith.constant 0 : i32
    %0 = arith.cmpi eq, %arg2, %c0_i32 : i32
    %1 = arith.extui %0 : i1 to i32
    %c0_i32_0 = arith.constant 0 : i32
    %2 = arith.cmpi ne, %1, %c0_i32_0 : i32
    scf.if %2 {
      %cst_10 = arith.constant 0.000000e+00 : f32
      %12 = vector.broadcast %cst_10 : f32 to vector<16x128xf32>
      %c0_11 = arith.constant 0 : index
      %c0_12 = arith.constant 0 : index
      %13 = vector.load %arg6[%c0_11, %c0_12] : memref<16x128xf32, #tpu.memory_space<vmem>>, vector<16x128xf32>
      tpu.vector_store %arg6[%c0_11, %c0_12], %12 {strides = array<i32>} : memref<16x128xf32, #tpu.memory_space<vmem>>, vector<16x128xf32>,
    } else {
    }
    %c0 = arith.constant 0 : index
    %c0_1 = arith.constant 0 : index
    %3 = vector.load %arg6[%c0, %c0_1] : memref<16x128xf32, #tpu.memory_space<vmem>>, vector<16x128xf32>
    %c0_2 = arith.constant 0 : index
    %c0_3 = arith.constant 0 : index
    %4 = vector.load %arg3[%c0_2, %c0_3] : memref<16x128xbf16, #tpu.memory_space<vmem>>, vector<16x128xbf16>
    %c0_4 = arith.constant 0 : index
    %c0_5 = arith.constant 0 : index
    %5 = vector.load %arg4[%c0_4, %c0_5] : memref<128x128xbf16, #tpu.memory_space<vmem>>, vector<128x128xbf16>
    %cst = arith.constant dense<0.000000e+00> : vector<16x128xf32>
    %6 = tpu.matmul %4, %5, %cst {dimension_numbers = #tpu.dot_dimension_numbers<[1], [0], [0], [1], [0, 0, 1, 1], [], []>} : vector<16x128xbf16>, vector<128x128xbf16>, vector<16x128xf32> -> vector<16x128xf32>
    %7 = arith.addf %3, %6 : vector<16x128xf32>
    %c0_6 = arith.constant 0 : index
    %c0_7 = arith.constant 0 : index
    %8 = vector.load %arg6[%c0_6, %c0_7] : memref<16x128xf32, #tpu.memory_space<vmem>>, vector<16x128xf32>
    tpu.vector_store %arg6[%c0_6, %c0_7], %7 {strides = array<i32>} : memref<16x128xf32, #tpu.memory_space<vmem>>, vector<16x128xf32>,
    %c0_i32_8 = arith.constant 0 : i32
    %9 = arith.cmpi eq, %arg2, %c0_i32_8 : i32
    %10 = arith.extui %9 : i1 to i32
    %c0_i32_9 = arith.constant 0 : i32
    %11 = arith.cmpi ne, %10, %c0_i32_9 : i32
    scf.if %11 {
      %c0_10 = arith.constant 0 : index
      %c0_11 = arith.constant 0 : index
      %12 = vector.load %arg6[%c0_10, %c0_11] : memref<16x128xf32, #tpu.memory_space<vmem>>, vector<16x128xf32>
      %c0_12 = arith.constant 0 : index
      %c0_13 = arith.constant 0 : index
      %13 = vector.load %arg5[%c0_12, %c0_13] : memref<16x128xf32, #tpu.memory_space<vmem>>, vector<16x128xf32>
      tpu.vector_store %arg5[%c0_12, %c0_13], %12 {strides = array<i32>} : memref<16x128xf32, #tpu.memory_space<vmem>>, vector<16x128xf32>,
    } else {
    }
    return
  }
  func.func @transform_0(%arg0: i32, %arg1: i32, %arg2: i32) -> (i32, i32) {
    %c0_i32 = arith.constant 0 : i32
    return %arg0, %arg2 : i32, i32
  }
  func.func @transform_1(%arg0: i32, %arg1: i32, %arg2: i32) -> (i32, i32) {
    %c0_i32 = arith.constant 0 : i32
    return %arg2, %arg1 : i32, i32
  }
  func.func @transform_2(%arg0: i32, %arg1: i32, %arg2: i32) -> (i32, i32) {
    %c0_i32 = arith.constant 0 : i32
    return %arg0, %arg1 : i32, i32
  }
}

</mosaic_0001>

<llo_original>
// kernel: attention_forward.3
$region0: #{attention_forward.3}
  #allocation0 [shape = 'u32[]', space=smem, size = 0x4, offset = 0x4, fixed_abs, tag = 'smem constant byte address 0x4 - core index']
  #allocation1 [shape = 'u32[72,128]{1,0:T(1,128)}', space=vmem, size = 0x9000, scoped, tag = 'internal scratch']
  #allocation2 [shape = 'f32[16,384]{1,0:T(8,128)}', space=vmem, size = 0x6000, scoped, tag = 'scratch operand']
  %s0 = inlined_call_operand.vmem [shape: bf16[16,128], index: 0, kind: input, shape index: {}]
  %s1 = inlined_call_operand.hbm [shape: bf16[128,384], index: 1, kind: input, shape index: {}]
  %s2 = inlined_call_operand.vmem [shape: bf16[16,384], index: 2, kind: output, shape index: {}]
  %s3 = sld [smem:[#allocation0]]
  $region30: #{attention_forward.3} parent=0
    _
  %s5 = ssub.s32 1, %s3
  %s6 = scalar_select 0, %s5, %s3
  $region1: #{attention_forward.3} parent=0
    #allocation3 [shape = 'u8[98304]{0}', space=vmem, size = 0x18000, scoped, tag = 'input window, operand 1, single buffered']
    #allocation4 [shape = 's32[1]{0}', space=sflag, size = 0x4, scoped, tag = 'scoped memory for attention_forward.3']
    %7 = vsyncpa [#allocation4], 0
    // Predicated region
    $region2: #{attention_forward.3} parent=1 // pred_check
      _
    $region3: #{attention_forward.3} parent=1 // pred_check_branch
      %9 = sbr.rel (0) target = $region5
    $region4: #{attention_forward.3} parent=1 // pred_region
      _
    $region5: #{attention_forward.3} parent=1 // pred_fallthru
      _
    // Predicated region
    $region6: #{attention_forward.3} parent=1 // pred_check
      _
    $region7: #{attention_forward.3} parent=1 // pred_check_branch
      %11 = sbr.rel (0) target = $region9
    $region8: #{attention_forward.3} parent=1 // pred_region
      %13 = vsyncadd [#allocation4], 0
      %s14 = sshll.u32 %s1, 4
      %s15 = int_to_ptr.hbm [resolvable:$true] %s14
      %s16 = sshll.u32 [#allocation3], 4
      %s17 = int_to_ptr.vmem [resolvable:$true] %s16
      %22 = dma.hbm_to_vmem [thread:$0]  %s15, 3072, %s17, [#allocation4], 192, 192, 12
    $region9: #{attention_forward.3} parent=1 // pred_fallthru
      _
    // Predicated region
    $region10: #{attention_forward.3} parent=1 // pred_check
      _
    $region11: #{attention_forward.3} parent=1 // pred_check_branch
      %24 = sbr.rel (0) target = $region13
    $region12: #{attention_forward.3} parent=1 // pred_region
      %26 = dma.done [#allocation4], 3072
    $region13: #{attention_forward.3} parent=1 // pred_fallthru
      _
    %p27 = scmp.eq.s32.totalorder 0, 0
    // Predicated region
    $region14: #{attention_forward.3} parent=1 // pred_check
      %p28 = pneg %p27
    $region15: #{attention_forward.3} parent=1 // pred_check_branch
      %30 = sbr.rel (%p28) target = $region17
    $region16: #{attention_forward.3} parent=1 // pred_region
      %31 = vst [vmem:[#allocation2] sm:$0xff] 0.0
      %32 = vst [vmem:[#allocation2 + $0x8] sm:$0xff] 0.0
      %33 = vst [vmem:[#allocation2 + $0x10] sm:$0xff] 0.0
      %34 = vst [vmem:[#allocation2 + $0x18] sm:$0xff] 0.0
      %35 = vst [vmem:[#allocation2 + $0x20] sm:$0xff] 0.0
      %36 = vst [vmem:[#allocation2 + $0x28] sm:$0xff] 0.0
    $region17: #{attention_forward.3} parent=1 // pred_fallthru
      _
    %v37 = vld [vmem:[#allocation2] sm:$0xff]
    %v38 = vld [vmem:[#allocation2 + $0x8] sm:$0xff]
    %v39 = vld [vmem:[#allocation2 + $0x10] sm:$0xff]
    %v40 = vld [vmem:[#allocation2 + $0x18] sm:$0xff]
    %v41 = vld [vmem:[#allocation2 + $0x20] sm:$0xff]
    %v42 = vld [vmem:[#allocation2 + $0x28] sm:$0xff]
    %v43 = vld [vmem:[%s0] sm:$0xf]
    %v44 = vld [vmem:[%s0 + $0x4] sm:$0xf]
    %v45 = vld [vmem:[#allocation3] sm:$0xff]
    %v46 = vld [vmem:[#allocation3 + $0x8] sm:$0xf]
    %v47 = vld [vmem:[#allocation3 + $0xc] sm:$0xff]
    %v48 = vld [vmem:[#allocation3 + $0x14] sm:$0xf]
    %v49 = vld [vmem:[#allocation3 + $0x18] sm:$0xff]
    %v50 = vld [vmem:[#allocation3 + $0x20] sm:$0xf]
    %v51 = vld [vmem:[#allocation3 + $0x24] sm:$0xff]
    %v52 = vld [vmem:[#allocation3 + $0x2c] sm:$0xf]
    %v53 = vld [vmem:[#allocation3 + $0x30] sm:$0xff]
    %v54 = vld [vmem:[#allocation3 + $0x38] sm:$0xf]
    %v55 = vld [vmem:[#allocation3 + $0x3c] sm:$0xff]
    %v56 = vld [vmem:[#allocation3 + $0x44] sm:$0xf]
    %v57 = vld [vmem:[#allocation3 + $0x48] sm:$0xff]
    %v58 = vld [vmem:[#allocation3 + $0x50] sm:$0xf]
    %v59 = vld [vmem:[#allocation3 + $0x54] sm:$0xff]
    %v60 = vld [vmem:[#allocation3 + $0x5c] sm:$0xf]
    %v61 = vld [vmem:[#allocation3 + $0x60] sm:$0xff]
    %v62 = vld [vmem:[#allocation3 + $0x68] sm:$0xf]
    %v63 = vld [vmem:[#allocation3 + $0x6c] sm:$0xff]
    %v64 = vld [vmem:[#allocation3 + $0x74] sm:$0xf]
    %v65 = vld [vmem:[#allocation3 + $0x78] sm:$0xff]
    %v66 = vld [vmem:[#allocation3 + $0x80] sm:$0xf]
    %v67 = vld [vmem:[#allocation3 + $0x84] sm:$0xff]
    %v68 = vld [vmem:[#allocation3 + $0x8c] sm:$0xf]
    %v69 = vld [vmem:[#allocation3 + $0x90] sm:$0xff]
    %v70 = vld [vmem:[#allocation3 + $0x98] sm:$0xf]
    %v71 = vld [vmem:[#allocation3 + $0x9c] sm:$0xff]
    %v72 = vld [vmem:[#allocation3 + $0xa4] sm:$0xf]
    %v73 = vld [vmem:[#allocation3 + $0xa8] sm:$0xff]
    %v74 = vld [vmem:[#allocation3 + $0xb0] sm:$0xf]
    %v75 = vld [vmem:[#allocation3 + $0xb4] sm:$0xff]
    %v76 = vld [vmem:[#allocation3 + $0xbc] sm:$0xf]
    %v79 = vunpack.c.l.b16 %v43
    %v80 = vunpack.c.l.b16 %v44
    %v81 = vpack.c.b16 %v80, %v79
    %v115 = vunpack.c.l.b16 %v45
    %v116 = vunpack.c.h.b16 %v45
    %v117 = vunpack.c.l.b16 %v46
    %v118 = vunpack.c.l.b16 %v47
    %v119 = vunpack.c.h.b16 %v47
    %v120 = vunpack.c.l.b16 %v48
    %v121 = vunpack.c.l.b16 %v49
    %v122 = vunpack.c.h.b16 %v49
    %v123 = vunpack.c.l.b16 %v50
    %v124 = vunpack.c.l.b16 %v51
    %v125 = vunpack.c.h.b16 %v51
    %v126 = vunpack.c.l.b16 %v52
    %v127 = vunpack.c.l.b16 %v53
    %v128 = vunpack.c.h.b16 %v53
    %v129 = vunpack.c.l.b16 %v54
    %v130 = vunpack.c.l.b16 %v55
    %v131 = vunpack.c.h.b16 %v55
    %v132 = vunpack.c.l.b16 %v56
    %v133 = vunpack.c.l.b16 %v57
    %v134 = vunpack.c.h.b16 %v57
    %v135 = vunpack.c.l.b16 %v58
    %v136 = vunpack.c.l.b16 %v59
    %v137 = vunpack.c.h.b16 %v59
    %v138 = vunpack.c.l.b16 %v60
    %v139 = vunpack.c.l.b16 %v61
    %v140 = vunpack.c.h.b16 %v61
    %v141 = vunpack.c.l.b16 %v62
    %v142 = vunpack.c.l.b16 %v63
    %v143 = vunpack.c.h.b16 %v63
    %v144 = vunpack.c.l.b16 %v64
    %v145 = vunpack.c.l.b16 %v65
    %v146 = vunpack.c.h.b16 %v65
    %v147 = vunpack.c.l.b16 %v66
    %v148 = vunpack.c.l.b16 %v67
    %v149 = vunpack.c.h.b16 %v67
    %v150 = vunpack.c.l.b16 %v68
    %v151 = vunpack.c.l.b16 %v69
    %v152 = vunpack.c.h.b16 %v69
    %v153 = vunpack.c.l.b16 %v70
    %v154 = vunpack.c.l.b16 %v71
    %v155 = vunpack.c.h.b16 %v71
    %v156 = vunpack.c.l.b16 %v72
    %v157 = vunpack.c.l.b16 %v73
    %v158 = vunpack.c.h.b16 %v73
    %v159 = vunpack.c.l.b16 %v74
    %v160 = vunpack.c.l.b16 %v75
    %v161 = vunpack.c.h.b16 %v75
    %v162 = vunpack.c.l.b16 %v76
    %v163 = vpack.c.b16 %v118, %v115
    %v164 = vpack.c.b16 %v119, %v116
    %v165 = vpack.c.b16 %v120, %v117
    %v166 = vpack.c.b16 %v124, %v121
    %v167 = vpack.c.b16 %v125, %v122
    %v168 = vpack.c.b16 %v126, %v123
    %v169 = vpack.c.b16 %v130, %v127
    %v170 = vpack.c.b16 %v131, %v128
    %v171 = vpack.c.b16 %v132, %v129
    %v172 = vpack.c.b16 %v136, %v133
    %v173 = vpack.c.b16 %v137, %v134
    %v174 = vpack.c.b16 %v138, %v135
    %v175 = vpack.c.b16 %v142, %v139
    %v176 = vpack.c.b16 %v143, %v140
    %v177 = vpack.c.b16 %v144, %v141
    %v178 = vpack.c.b16 %v148, %v145
    %v179 = vpack.c.b16 %v149, %v146
    %v180 = vpack.c.b16 %v150, %v147
    %v181 = vpack.c.b16 %v154, %v151
    %v182 = vpack.c.b16 %v155, %v152
    %v183 = vpack.c.b16 %v156, %v153
    %v184 = vpack.c.b16 %v160, %v157
    %v185 = vpack.c.b16 %v161, %v158
    %v186 = vpack.c.b16 %v162, %v159
    %211 = vmatpush.bf16.msra.mxu0 %v184
    %212 = vmatpush.bf16.msra.mxu0 %v181
    %213 = vmatpush.bf16.msra.mxu0 %v178
    %214 = vmatpush.bf16.msra.mxu0 %v175
    %215 = vmatpush.bf16.msra.mxu0 %v172
    %216 = vmatpush.bf16.msra.mxu0 %v169
    %217 = vmatpush.bf16.msra.mxu0 %v166
    %218 = vmatpush.bf16.msra.mxu0 %v163
    %219 = vmatmul.bf16.gmra.mxu0 %v81
    %v220 = vpop.f32.mrf.mxu0
    %v221 = vadd.f32 0.0, %v220
    %v222 = vpop.f32.mrf.mxu0
    %v223 = vadd.f32 0.0, %v222
    %224 = vdwg.mxu0
    %225 = vmatpush.bf16.msra.mxu0 %v185
    %226 = vmatpush.bf16.msra.mxu0 %v182
    %227 = vmatpush.bf16.msra.mxu0 %v179
    %228 = vmatpush.bf16.msra.mxu0 %v176
    %229 = vmatpush.bf16.msra.mxu0 %v173
    %230 = vmatpush.bf16.msra.mxu0 %v170
    %231 = vmatpush.bf16.msra.mxu0 %v167
    %232 = vmatpush.bf16.msra.mxu0 %v164
    %233 = vmatmul.bf16.gmra.mxu0 %v81
    %v234 = vpop.f32.mrf.mxu0
    %v235 = vadd.f32 0.0, %v234
    %v236 = vpop.f32.mrf.mxu0
    %v237 = vadd.f32 0.0, %v236
    %238 = vdwg.mxu0
    %239 = vmatpush.bf16.msra.mxu0 %v186
    %240 = vmatpush.bf16.msra.mxu0 %v183
    %241 = vmatpush.bf16.msra.mxu0 %v180
    %242 = vmatpush.bf16.msra.mxu0 %v177
    %243 = vmatpush.bf16.msra.mxu0 %v174
    %244 = vmatpush.bf16.msra.mxu0 %v171
    %245 = vmatpush.bf16.msra.mxu0 %v168
    %246 = vmatpush.bf16.msra.mxu0 %v165
    %247 = vmatmul.bf16.gmra.mxu0 %v81
    %v248 = vpop.f32.mrf.mxu0
    %v249 = vadd.f32 0.0, %v248
    %v250 = vpop.f32.mrf.mxu0
    %v251 = vadd.f32 0.0, %v250
    %252 = vdwg.mxu0
    %v253 = vadd.f32 %v37, %v221
    %v254 = vadd.f32 %v38, %v235
    %v255 = vadd.f32 %v39, %v249
    %v256 = vadd.f32 %v40, %v223
    %v257 = vadd.f32 %v41, %v237
    %v258 = vadd.f32 %v42, %v251
    %259 = vst [vmem:[#allocation2] sm:$0xff] %v253
    %260 = vst [vmem:[#allocation2 + $0x8] sm:$0xff] %v254
    %261 = vst [vmem:[#allocation2 + $0x10] sm:$0xff] %v255
    %262 = vst [vmem:[#allocation2 + $0x18] sm:$0xff] %v256
    %263 = vst [vmem:[#allocation2 + $0x20] sm:$0xff] %v257
    %264 = vst [vmem:[#allocation2 + $0x28] sm:$0xff] %v258
    // Predicated region
    $region18: #{attention_forward.3} parent=1 // pred_check
      %p265 = pneg %p27
    $region19: #{attention_forward.3} parent=1 // pred_check_branch
      %267 = sbr.rel (%p265) target = $region21
    $region20: #{attention_forward.3} parent=1 // pred_region
      %v268 = vld [vmem:[#allocation2] sm:$0xff]
      %v269 = vld [vmem:[#allocation2 + $0x8] sm:$0xff]
      %v270 = vld [vmem:[#allocation2 + $0x10] sm:$0xff]
      %v271 = vld [vmem:[#allocation2 + $0x18] sm:$0xff]
      %v272 = vld [vmem:[#allocation2 + $0x20] sm:$0xff]
      %v273 = vld [vmem:[#allocation2 + $0x28] sm:$0xff]
      %v274 = vpack.c.bf16 %v269, %v268
      %v275 = vpack.c.bf16 %v270, %v270
      %v276 = vpack.c.bf16 %v272, %v271
      %v277 = vpack.c.bf16 %v273, %v273
      %278 = vst [vmem:[%s2] sm:$0xff] %v274
      %279 = vst [vmem:[%s2 + $0x8] sm:$0xf] %v275
      %280 = vst [vmem:[%s2 + $0xc] sm:$0xff] %v276
      %281 = vst [vmem:[%s2 + $0x14] sm:$0xf] %v277
    $region21: #{attention_forward.3} parent=1 // pred_fallthru
      _
    // Predicated region
    $region22: #{attention_forward.3} parent=1 // pred_check
      _
    $region23: #{attention_forward.3} parent=1 // pred_check_branch
      %283 = sbr.rel (0) target = $region25
    $region24: #{attention_forward.3} parent=1 // pred_region
      _
    $region25: #{attention_forward.3} parent=1 // pred_fallthru
      _
    // Predicated region
    $region26: #{attention_forward.3} parent=1 // pred_check
      _
    $region27: #{attention_forward.3} parent=1 // pred_check_branch
      %285 = sbr.rel (0) target = $region29
    $region28: #{attention_forward.3} parent=1 // pred_region
      _
    $region29: #{attention_forward.3} parent=1 // pred_fallthru
      _
    %286 = vsyncpa [#allocation4], 1

// kernel: attention_forward.5
$region0: #{attention_forward.5}
  #allocation0 [shape = 'u32[]', space=smem, size = 0x4, offset = 0x4, fixed_abs, tag = 'smem constant byte address 0x4 - core index']
  #allocation1 [shape = 'u32[72,128]{1,0:T(1,128)}', space=vmem, size = 0x9000, scoped, tag = 'internal scratch']
  #allocation2 [shape = 'f32[16,128]{1,0:T(8,128)}', space=vmem, size = 0x2000, scoped, tag = 'scratch operand']
  %s0 = inlined_call_operand.vmem [shape: bf16[16,128], index: 0, kind: input, shape index: {}]
  %s1 = inlined_call_operand.vmem [shape: bf16[128,128], index: 1, kind: input, shape index: {}]
  %s2 = inlined_call_operand.hbm [shape: f32[16,128], index: 2, kind: output, shape index: {}]
  %s3 = sld [smem:[#allocation0]]
  $region26: #{attention_forward.5} parent=0
    _
  %s5 = ssub.s32 1, %s3
  %s6 = scalar_select 0, %s5, %s3
  $region1: #{attention_forward.5} parent=0
    #allocation3 [shape = 'u8[8192]{0}', space=vmem, size = 0x2000, scoped, tag = 'output window, operand 0, single buffered']
    #allocation4 [shape = 's32[1]{0}', space=sflag, size = 0x4, scoped, tag = 'scoped memory for attention_forward.5']
    %7 = vsyncpa [#allocation4], 0
    // Predicated region
    $region2: #{attention_forward.5} parent=1 // pred_check
      _
    $region3: #{attention_forward.5} parent=1 // pred_check_branch
      %9 = sbr.rel (0) target = $region5
    $region4: #{attention_forward.5} parent=1 // pred_region
      _
    $region5: #{attention_forward.5} parent=1 // pred_fallthru
      _
    // Predicated region
    $region6: #{attention_forward.5} parent=1 // pred_check
      _
    $region7: #{attention_forward.5} parent=1 // pred_check_branch
      %11 = sbr.rel (0) target = $region9
    $region8: #{attention_forward.5} parent=1 // pred_region
      _
    $region9: #{attention_forward.5} parent=1 // pred_fallthru
      _
    %p12 = scmp.eq.s32.totalorder 0, 0
    // Predicated region
    $region10: #{attention_forward.5} parent=1 // pred_check
      %p13 = pneg %p12
    $region11: #{attention_forward.5} parent=1 // pred_check_branch
      %15 = sbr.rel (%p13) target = $region13
    $region12: #{attention_forward.5} parent=1 // pred_region
      %16 = vst [vmem:[#allocation2] sm:$0xff] 0.0
      %17 = vst [vmem:[#allocation2 + $0x8] sm:$0xff] 0.0
    $region13: #{attention_forward.5} parent=1 // pred_fallthru
      _
    %v18 = vld [vmem:[#allocation2] sm:$0xff]
    %v19 = vld [vmem:[#allocation2 + $0x8] sm:$0xff]
    %v20 = vld [vmem:[%s0] sm:$0xf]
    %v21 = vld [vmem:[%s0 + $0x4] sm:$0xf]
    %v22 = vld [vmem:[%s1] sm:$0xf]
    %v23 = vld [vmem:[%s1 + $0x4] sm:$0xf]
    %v24 = vld [vmem:[%s1 + $0x8] sm:$0xf]
    %v25 = vld [vmem:[%s1 + $0xc] sm:$0xf]
    %v26 = vld [vmem:[%s1 + $0x10] sm:$0xf]
    %v27 = vld [vmem:[%s1 + $0x14] sm:$0xf]
    %v28 = vld [vmem:[%s1 + $0x18] sm:$0xf]
    %v29 = vld [vmem:[%s1 + $0x1c] sm:$0xf]
    %v30 = vld [vmem:[%s1 + $0x20] sm:$0xf]
    %v31 = vld [vmem:[%s1 + $0x24] sm:$0xf]
    %v32 = vld [vmem:[%s1 + $0x28] sm:$0xf]
    %v33 = vld [vmem:[%s1 + $0x2c] sm:$0xf]
    %v34 = vld [vmem:[%s1 + $0x30] sm:$0xf]
    %v35 = vld [vmem:[%s1 + $0x34] sm:$0xf]
    %v36 = vld [vmem:[%s1 + $0x38] sm:$0xf]
    %v37 = vld [vmem:[%s1 + $0x3c] sm:$0xf]
    %v40 = vunpack.c.l.b16 %v20
    %v41 = vunpack.c.l.b16 %v21
    %v42 = vpack.c.b16 %v41, %v40
    %v60 = vunpack.c.l.b16 %v22
    %v61 = vunpack.c.l.b16 %v23
    %v62 = vunpack.c.l.b16 %v24
    %v63 = vunpack.c.l.b16 %v25
    %v64 = vunpack.c.l.b16 %v26
    %v65 = vunpack.c.l.b16 %v27
    %v66 = vunpack.c.l.b16 %v28
    %v67 = vunpack.c.l.b16 %v29
    %v68 = vunpack.c.l.b16 %v30
    %v69 = vunpack.c.l.b16 %v31
    %v70 = vunpack.c.l.b16 %v32
    %v71 = vunpack.c.l.b16 %v33
    %v72 = vunpack.c.l.b16 %v34
    %v73 = vunpack.c.l.b16 %v35
    %v74 = vunpack.c.l.b16 %v36
    %v75 = vunpack.c.l.b16 %v37
    %v76 = vpack.c.b16 %v61, %v60
    %v77 = vpack.c.b16 %v63, %v62
    %v78 = vpack.c.b16 %v65, %v64
    %v79 = vpack.c.b16 %v67, %v66
    %v80 = vpack.c.b16 %v69, %v68
    %v81 = vpack.c.b16 %v71, %v70
    %v82 = vpack.c.b16 %v73, %v72
    %v83 = vpack.c.b16 %v75, %v74
    %92 = vmatpush.bf16.msra.mxu0 %v83
    %93 = vmatpush.bf16.msra.mxu0 %v82
    %94 = vmatpush.bf16.msra.mxu0 %v81
    %95 = vmatpush.bf16.msra.mxu0 %v80
    %96 = vmatpush.bf16.msra.mxu0 %v79
    %97 = vmatpush.bf16.msra.mxu0 %v78
    %98 = vmatpush.bf16.msra.mxu0 %v77
    %99 = vmatpush.bf16.msra.mxu0 %v76
    %100 = vmatmul.bf16.gmra.mxu0 %v42
    %v101 = vpop.f32.mrf.mxu0
    %v102 = vadd.f32 0.0, %v101
    %v103 = vpop.f32.mrf.mxu0
    %v104 = vadd.f32 0.0, %v103
    %105 = vdwg.mxu0
    %v106 = vadd.f32 %v18, %v102
    %v107 = vadd.f32 %v19, %v104
    %108 = vst [vmem:[#allocation2] sm:$0xff] %v106
    %109 = vst [vmem:[#allocation2 + $0x8] sm:$0xff] %v107
    // Predicated region
    $region14: #{attention_forward.5} parent=1 // pred_check
      %p110 = pneg %p12
    $region15: #{attention_forward.5} parent=1 // pred_check_branch
      %112 = sbr.rel (%p110) target = $region17
    $region16: #{attention_forward.5} parent=1 // pred_region
      %v113 = vld [vmem:[#allocation2] sm:$0xff]
      %v114 = vld [vmem:[#allocation2 + $0x8] sm:$0xff]
      %115 = vst [vmem:[#allocation3] sm:$0xff] %v113
      %116 = vst [vmem:[#allocation3 + $0x8] sm:$0xff] %v114
    $region17: #{attention_forward.5} parent=1 // pred_fallthru
      _
    // Predicated region
    $region18: #{attention_forward.5} parent=1 // pred_check
      _
    $region19: #{attention_forward.5} parent=1 // pred_check_branch
      %118 = sbr.rel (0) target = $region21
    $region20: #{attention_forward.5} parent=1 // pred_region
      %120 = vsyncadd [#allocation4], 0
      %s121 = sshll.u32 [#allocation3], 4
      %s122 = int_to_ptr.vmem [resolvable:$true] %s121
      %s123 = sshll.u32 %s2, 4
      %s124 = int_to_ptr.hbm [resolvable:$true] %s123
      %129 = dma.vmem_to_hbm [thread:$0]  %s122, 256, %s124, [#allocation4], 128, 128, 8
    $region21: #{attention_forward.5} parent=1 // pred_fallthru
      _
    // Predicated region
    $region22: #{attention_forward.5} parent=1 // pred_check
      _
    $region23: #{attention_forward.5} parent=1 // pred_check_branch
      %131 = sbr.rel (0) target = $region25
    $region24: #{attention_forward.5} parent=1 // pred_region
      %133 = dma.done [#allocation4], 256
    $region25: #{attention_forward.5} parent=1 // pred_fallthru
      _
    %134 = vsyncpa [#allocation4], 1

// kernel: attention_forward.4
$region0: #{attention_forward.4}
  #allocation0 [shape = 'u32[]', space=smem, size = 0x4, offset = 0x4, fixed_abs, tag = 'smem constant byte address 0x4 - core index']
  #allocation1 [shape = 'u32[72,128]{1,0:T(1,128)}', space=vmem, size = 0x9000, scoped, tag = 'internal scratch']
  #allocation2 [shape = 'f32[4,8,1]{2,1,0:T(8,128)}', space=vmem, size = 0x4000, scoped, tag = 'scratch operand']
  #allocation3 [shape = 'f32[4,8,1]{2,1,0:T(8,128)}', space=vmem, size = 0x4000, scoped, tag = 'scratch operand']
  #allocation4 [shape = 'f32[4,8,32]{2,1,0:T(8,128)}', space=vmem, size = 0x4000, scoped, tag = 'scratch operand']
  %s0 = inlined_call_operand.vmem [shape: bf16[2,8,128], index: 0, kind: input, shape index: {}]
  %s1 = inlined_call_operand.vmem [shape: bf16[2,8,128], index: 1, kind: input, shape index: {}]
  %s2 = inlined_call_operand.vmem [shape: bf16[2,8,128], index: 2, kind: input, shape index: {}]
  %s3 = inlined_call_operand.vmem [shape: bf16[8,8], index: 3, kind: input, shape index: {}]
  %s4 = inlined_call_operand.vmem [shape: bf16[2,8,128], index: 4, kind: output, shape index: {}]
  %s5 = sld [smem:[#allocation0]]
  $region57: #{attention_forward.4} parent=0
    _
  %s7 = ssub.s32 1, %s5
  %s8 = scalar_select 0, %s7, %s5
  loop: start=0, step=1, limit=4
  $region2: #{attention_forward.4} parent=0 // loop_pre_header
    _
  $region3: #{attention_forward.4} parent=0 // loop_header
    %s10 = sphi 0, %s14
    %p11 = scmp.ge.s32.totalorder %s10, 4
    %s17 = sphi 0, %s43
    %s18 = sphi 0, %s39
    %s19 = sphi 0, %s35
    %s20 = sphi 0, %s31
    %s21 = sphi 0, %s17
    %s22 = sphi 0, %s18
    %s23 = sphi 0, %s19
    %s24 = sphi 0, %s20
    %s25 = sphi 0, %s21
    %s26 = sphi 0, %s22
    %s27 = sphi 0, %s23
    %s28 = sphi 0, %s24
    %s50 = sphi 0, %s52
    %s53 = sphi 0, %s50
    %s54 = sphi 0, %s53
    %s70 = sphi 0, %s54
    %s80 = sphi 0, %s82
    %s83 = sphi 0, %s80
    %s84 = sphi 0, %s83
    %s100 = sphi 0, %s84
    %s110 = sphi 0, %s112
    %s113 = sphi 0, %s110
    %s114 = sphi 0, %s113
    %s130 = sphi 0, %s114
    %s138 = sphi 0, %s140
    %s141 = sphi 0, %s138
    %s142 = sphi 0, %s141
    %s158 = sphi 0, %s142
    %s168 = sphi 0, %s170
    %s171 = sphi 0, %s168
    %s172 = sphi 0, %s171
    %s188 = sphi 0, %s172
  $region4: #{attention_forward.4} parent=0 // loop_header_branch
    %13 = sbr.rel (%p11) target = $region8
  $region5: #{attention_forward.4} parent=0 // loop_body
    %s15 = ssub.s32 %s10, 1
    %s16 = ssub.s32 %s10, 2
    %s29 = sadd.s32 1, %s20
    %p30 = scmp.ge.s32.totalorder %s29, 1
    %s31 = scalar_select %p30, 0, %s29
    %s32 = sadd.s32 1, %s19
    %s33 = scalar_select %p30, %s32, %s19
    %p34 = scmp.ge.s32.totalorder %s33, 1
    %s35 = scalar_select %p34, 0, %s33
    %s36 = sadd.s32 1, %s18
    %s37 = scalar_select %p34, %s36, %s18
    %p38 = scmp.ge.s32.totalorder %s37, 1
    %s39 = scalar_select %p38, 0, %s37
    %s40 = sadd.s32 1, %s17
    %s41 = scalar_select %p38, %s40, %s17
    %p42 = scmp.ge.s32.totalorder %s41, 2
    %s43 = scalar_select %p42, 0, %s41
    %s44 = ssub.s32 %s17, %s43
    %s45 = ssub.s32 %s19, %s35
    %s46 = sor.u32 %s44, %s45
    %s47 = ssub.s32 %s18, %s39
    %s48 = sor.u32 %s46, %s47
    %p49 = scmp.eq.s32.totalorder %s48, 0
    %s51 = sadd.s32 %s50, 1
    %s52 = scalar_select %p49, %s50, %s51
    %p55 = pneg %p49
    %p56 = scmp.eq.s32.totalorder %s10, 1
    %p57 = por %p55, %p56
    %p58 = scmp.ne.s32.totalorder %s50, %s53
    %p59 = scmp.eq.s32.totalorder %s10, 0
    %p60 = por %p58, %p59
    %p61 = scmp.ne.s32.totalorder %s50, %s53
    %p62 = scmp.eq.s32.totalorder %s15, 1
    %p63 = por %p61, %p62
    %p64 = scmp.ne.s32.totalorder %s53, %s54
    %p65 = scmp.eq.s32.totalorder %s15, 0
    %p66 = por %p64, %p65
    %p67 = scmp.ne.s32.totalorder %s53, %s54
    %p68 = scmp.eq.s32.totalorder %s16, 1
    %p69 = por %p67, %p68
    %p71 = scmp.ne.s32.totalorder %s54, %s70
    %p72 = scmp.eq.s32.totalorder %s16, 0
    %p73 = por %p71, %p72
    %s74 = ssub.s32 %s17, %s43
    %s75 = ssub.s32 %s20, %s31
    %s76 = sor.u32 %s74, %s75
    %s77 = ssub.s32 %s18, %s39
    %s78 = sor.u32 %s76, %s77
    %p79 = scmp.eq.s32.totalorder %s78, 0
    %s81 = sadd.s32 %s80, 1
    %s82 = scalar_select %p79, %s80, %s81
    %p85 = pneg %p79
    %p86 = scmp.eq.s32.totalorder %s10, 1
    %p87 = por %p85, %p86
    %p88 = scmp.ne.s32.totalorder %s80, %s83
    %p89 = scmp.eq.s32.totalorder %s10, 0
    %p90 = por %p88, %p89
    %p91 = scmp.ne.s32.totalorder %s80, %s83
    %p92 = scmp.eq.s32.totalorder %s15, 1
    %p93 = por %p91, %p92
    %p94 = scmp.ne.s32.totalorder %s83, %s84
    %p95 = scmp.eq.s32.totalorder %s15, 0
    %p96 = por %p94, %p95
    %p97 = scmp.ne.s32.totalorder %s83, %s84
    %p98 = scmp.eq.s32.totalorder %s16, 1
    %p99 = por %p97, %p98
    %p101 = scmp.ne.s32.totalorder %s84, %s100
    %p102 = scmp.eq.s32.totalorder %s16, 0
    %p103 = por %p101, %p102
    %s104 = ssub.s32 %s17, %s43
    %s105 = ssub.s32 %s20, %s31
    %s106 = sor.u32 %s104, %s105
    %s107 = ssub.s32 %s18, %s39
    %s108 = sor.u32 %s106, %s107
    %p109 = scmp.eq.s32.totalorder %s108, 0
    %s111 = sadd.s32 %s110, 1
    %s112 = scalar_select %p109, %s110, %s111
    %p115 = pneg %p109
    %p116 = scmp.eq.s32.totalorder %s10, 1
    %p117 = por %p115, %p116
    %p118 = scmp.ne.s32.totalorder %s110, %s113
    %p119 = scmp.eq.s32.totalorder %s10, 0
    %p120 = por %p118, %p119
    %p121 = scmp.ne.s32.totalorder %s110, %s113
    %p122 = scmp.eq.s32.totalorder %s15, 1
    %p123 = por %p121, %p122
    %p124 = scmp.ne.s32.totalorder %s113, %s114
    %p125 = scmp.eq.s32.totalorder %s15, 0
    %p126 = por %p124, %p125
    %p127 = scmp.ne.s32.totalorder %s113, %s114
    %p128 = scmp.eq.s32.totalorder %s16, 1
    %p129 = por %p127, %p128
    %p131 = scmp.ne.s32.totalorder %s114, %s130
    %p132 = scmp.eq.s32.totalorder %s16, 0
    %p133 = por %p131, %p132
    %s134 = ssub.s32 %s19, %s35
    %s135 = ssub.s32 %s20, %s31
    %s136 = sor.u32 %s134, %s135
    %p137 = scmp.eq.s32.totalorder %s136, 0
    %s139 = sadd.s32 %s138, 1
    %s140 = scalar_select %p137, %s138, %s139
    %p143 = pneg %p137
    %p144 = scmp.eq.s32.totalorder %s10, 1
    %p145 = por %p143, %p144
    %p146 = scmp.ne.s32.totalorder %s138, %s141
    %p147 = scmp.eq.s32.totalorder %s10, 0
    %p148 = por %p146, %p147
    %p149 = scmp.ne.s32.totalorder %s138, %s141
    %p150 = scmp.eq.s32.totalorder %s15, 1
    %p151 = por %p149, %p150
    %p152 = scmp.ne.s32.totalorder %s141, %s142
    %p153 = scmp.eq.s32.totalorder %s15, 0
    %p154 = por %p152, %p153
    %p155 = scmp.ne.s32.totalorder %s141, %s142
    %p156 = scmp.eq.s32.totalorder %s16, 1
    %p157 = por %p155, %p156
    %p159 = scmp.ne.s32.totalorder %s142, %s158
    %p160 = scmp.eq.s32.totalorder %s16, 0
    %p161 = por %p159, %p160
    %s162 = ssub.s32 %s17, %s43
    %s163 = ssub.s32 %s19, %s35
    %s164 = sor.u32 %s162, %s163
    %s165 = ssub.s32 %s18, %s39
    %s166 = sor.u32 %s164, %s165
    %p167 = scmp.eq.s32.totalorder %s166, 0
    %s169 = sadd.s32 %s168, 1
    %s170 = scalar_select %p167, %s168, %s169
    %p173 = pneg %p167
    %p174 = scmp.eq.s32.totalorder %s10, 1
    %p175 = por %p173, %p174
    %p176 = scmp.ne.s32.totalorder %s168, %s171
    %p177 = scmp.eq.s32.totalorder %s10, 0
    %p178 = por %p176, %p177
    %p179 = scmp.ne.s32.totalorder %s168, %s171
    %p180 = scmp.eq.s32.totalorder %s15, 1
    %p181 = por %p179, %p180
    %p182 = scmp.ne.s32.totalorder %s171, %s172
    %p183 = scmp.eq.s32.totalorder %s15, 0
    %p184 = por %p182, %p183
    %p185 = scmp.ne.s32.totalorder %s171, %s172
    %p186 = scmp.eq.s32.totalorder %s16, 1
    %p187 = por %p185, %p186
    %p189 = scmp.ne.s32.totalorder %s172, %s188
    %p190 = scmp.eq.s32.totalorder %s16, 0
    %p191 = por %p189, %p190
    %p192 = scmp.le.s32.totalorder 1, %s10
    %p193 = scmp.lt.s32.totalorder %s10, 3
    %p194 = pnand %p192, %p193
    %p195 = pneg %p194
    // Predicated region
    $region9: #{attention_forward.4} parent=5 // pred_check
      _
    $region10: #{attention_forward.4} parent=5 // pred_check_branch
      %197 = sbr.rel (%p194) target = $region12
    $region11: #{attention_forward.4} parent=5 // pred_region
      %s198 = ssub.s32 %s10, 1
      // Predicated region
      $region13: #{attention_forward.4} parent=11 // pred_check
        %p199 = pneg %p154
      $region14: #{attention_forward.4} parent=11 // pred_check_branch
        %201 = sbr.rel (%p199) target = $region16
      $region15: #{attention_forward.4} parent=11 // pred_region
        %p202 = scmp.lt.s32.totalorder %s23, 0
        %s203 = scalar_select %p202, %s23, 0
        %p204 = scmp.lt.s32.totalorder %s24, 0
        %s205 = scalar_select %p204, %s24, 0
        %s206 = sadd.s32 %s205, %s203
        %s207 = smul.addr %s206, 4
        %s208 = scalar_lea.vmem %s3, %s207
      $region16: #{attention_forward.4} parent=11 // pred_fallthru
        _
    $region12: #{attention_forward.4} parent=5 // pred_fallthru
      _
    %p209 = scmp.lt.s32.totalorder %s10, 2
    // Predicated region
    $region17: #{attention_forward.4} parent=5 // pred_check
      %p210 = pneg %p209
    $region18: #{attention_forward.4} parent=5 // pred_check_branch
      %212 = sbr.rel (%p210) target = $region20
    $region19: #{attention_forward.4} parent=5 // pred_region
      // Predicated region
      $region21: #{attention_forward.4} parent=19 // pred_check
        %p213 = pneg %p60
      $region22: #{attention_forward.4} parent=19 // pred_check_branch
        %215 = sbr.rel (%p213) target = $region24
      $region23: #{attention_forward.4} parent=19 // pred_region
        %p216 = scmp.lt.s32.totalorder %s17, 1
        %s217 = scalar_select %p216, %s17, 1
        %p218 = scmp.lt.s32.totalorder %s19, 0
        %s219 = scalar_select %p218, %s19, 0
        %p220 = scmp.lt.s32.totalorder %s18, 0
        %s221 = scalar_select %p220, %s18, 0
        %s222 = sadd.s32 %s221, %s219
        %s223 = sadd.s32 %s222, %s217
        %s224 = smul.addr %s223, 4
        %s225 = scalar_lea.vmem %s0, %s224
      $region24: #{attention_forward.4} parent=19 // pred_fallthru
        _
      // Predicated region
      $region25: #{attention_forward.4} parent=19 // pred_check
        %p226 = pneg %p90
      $region26: #{attention_forward.4} parent=19 // pred_check_branch
        %228 = sbr.rel (%p226) target = $region28
      $region27: #{attention_forward.4} parent=19 // pred_region
        %p229 = scmp.lt.s32.totalorder %s17, 1
        %s230 = scalar_select %p229, %s17, 1
        %p231 = scmp.lt.s32.totalorder %s20, 0
        %s232 = scalar_select %p231, %s20, 0
        %p233 = scmp.lt.s32.totalorder %s18, 0
        %s234 = scalar_select %p233, %s18, 0
        %s235 = sadd.s32 %s234, %s232
        %s236 = sadd.s32 %s235, %s230
        %s237 = smul.addr %s236, 4
        %s238 = scalar_lea.vmem %s1, %s237
      $region28: #{attention_forward.4} parent=19 // pred_fallthru
        _
      // Predicated region
      $region29: #{attention_forward.4} parent=19 // pred_check
        %p239 = pneg %p120
      $region30: #{attention_forward.4} parent=19 // pred_check_branch
        %241 = sbr.rel (%p239) target = $region32
      $region31: #{attention_forward.4} parent=19 // pred_region
        %p242 = scmp.lt.s32.totalorder %s17, 1
        %s243 = scalar_select %p242, %s17, 1
        %p244 = scmp.lt.s32.totalorder %s20, 0
        %s245 = scalar_select %p244, %s20, 0
        %p246 = scmp.lt.s32.totalorder %s18, 0
        %s247 = scalar_select %p246, %s18, 0
        %s248 = sadd.s32 %s247, %s245
        %s249 = sadd.s32 %s248, %s243
        %s250 = smul.addr %s249, 4
        %s251 = scalar_lea.vmem %s2, %s250
      $region32: #{attention_forward.4} parent=19 // pred_fallthru
        _
    $region20: #{attention_forward.4} parent=5 // pred_fallthru
      _
    %p252 = scmp.le.s32.totalorder 1, %s10
    %p253 = scmp.lt.s32.totalorder %s10, 3
    %p254 = pnand %p252, %p253
    %p255 = pneg %p254
    // Predicated region
    $region33: #{attention_forward.4} parent=5 // pred_check
      _
    $region34: #{attention_forward.4} parent=5 // pred_check_branch
      %257 = sbr.rel (%p254) target = $region36
    $region35: #{attention_forward.4} parent=5 // pred_region
      %s258 = ssub.s32 %s10, 1
      %p259 = scmp.lt.s32.totalorder %s21, 1
      %s260 = scalar_select %p259, %s21, 1
      %p261 = scmp.lt.s32.totalorder %s23, 0
      %s262 = scalar_select %p261, %s23, 0
      %p263 = scmp.lt.s32.totalorder %s22, 0
      %s264 = scalar_select %p263, %s22, 0
      %s265 = sadd.s32 %s264, %s262
      %s266 = sadd.s32 %s265, %s260
      %s267 = smul.addr %s266, 4
      %s268 = scalar_lea.vmem %s0, %s267
      %p269 = pneg %p66
      %p270 = pneg %p63
      %p271 = scmp.lt.s32.totalorder %s21, 1
      %s272 = scalar_select %p271, %s21, 1
      %p273 = scmp.lt.s32.totalorder %s24, 0
      %s274 = scalar_select %p273, %s24, 0
      %p275 = scmp.lt.s32.totalorder %s22, 0
      %s276 = scalar_select %p275, %s22, 0
      %s277 = sadd.s32 %s276, %s274
      %s278 = sadd.s32 %s277, %s272
      %s279 = smul.addr %s278, 4
      %s280 = scalar_lea.vmem %s1, %s279
      %p281 = pneg %p96
      %p282 = pneg %p93
      %p283 = scmp.lt.s32.totalorder %s21, 1
      %s284 = scalar_select %p283, %s21, 1
      %p285 = scmp.lt.s32.totalorder %s24, 0
      %s286 = scalar_select %p285, %s24, 0
      %p287 = scmp.lt.s32.totalorder %s22, 0
      %s288 = scalar_select %p287, %s22, 0
      %s289 = sadd.s32 %s288, %s286
      %s290 = sadd.s32 %s289, %s284
      %s291 = smul.addr %s290, 4
      %s292 = scalar_lea.vmem %s2, %s291
      %p293 = pneg %p126
      %p294 = pneg %p123
      %p295 = scmp.lt.s32.totalorder %s23, 0
      %s296 = scalar_select %p295, %s23, 0
      %p297 = scmp.lt.s32.totalorder %s24, 0
      %s298 = scalar_select %p297, %s24, 0
      %s299 = sadd.s32 %s298, %s296
      %s300 = smul.addr %s299, 4
      %s301 = scalar_lea.vmem %s3, %s300
      %p302 = pneg %p154
      %p303 = pneg %p151
      %p304 = pneg %p184
      %p305 = pneg %p181
      %p306 = scmp.lt.s32.totalorder %s21, 1
      %s307 = scalar_select %p306, %s21, 1
      %p308 = scmp.lt.s32.totalorder %s23, 0
      %s309 = scalar_select %p308, %s23, 0
      %p310 = scmp.lt.s32.totalorder %s22, 0
      %s311 = scalar_select %p310, %s22, 0
      %s312 = sadd.s32 %s311, %s309
      %s313 = sadd.s32 %s312, %s307
      %s314 = smul.addr %s313, 4
      %s315 = scalar_lea.vmem %s4, %s314
      %p316 = scmp.lt.s32.totalorder %s21, 1
      %s317 = scalar_select %p316, %s21, 1
      %p318 = scmp.lt.s32.totalorder %s23, 0
      %s319 = scalar_select %p318, %s23, 0
      %p320 = scmp.lt.s32.totalorder %s22, 0
      %s321 = scalar_select %p320, %s22, 0
      %s322 = sadd.s32 %s321, %s319
      %s323 = sadd.s32 %s322, %s317
      %s324 = smul.addr %s323, 4
      %s325 = scalar_lea.vmem %s0, %s324
      %p326 = scmp.lt.s32.totalorder %s21, 1
      %s327 = scalar_select %p326, %s21, 1
      %p328 = scmp.lt.s32.totalorder %s24, 0
      %s329 = scalar_select %p328, %s24, 0
      %p330 = scmp.lt.s32.totalorder %s22, 0
      %s331 = scalar_select %p330, %s22, 0
      %s332 = sadd.s32 %s331, %s329
      %s333 = sadd.s32 %s332, %s327
      %s334 = smul.addr %s333, 4
      %s335 = scalar_lea.vmem %s1, %s334
      %p336 = scmp.lt.s32.totalorder %s21, 1
      %s337 = scalar_select %p336, %s21, 1
      %p338 = scmp.lt.s32.totalorder %s24, 0
      %s339 = scalar_select %p338, %s24, 0
      %p340 = scmp.lt.s32.totalorder %s22, 0
      %s341 = scalar_select %p340, %s22, 0
      %s342 = sadd.s32 %s341, %s339
      %s343 = sadd.s32 %s342, %s337
      %s344 = smul.addr %s343, 4
      %s345 = scalar_lea.vmem %s2, %s344
      %p346 = scmp.lt.s32.totalorder %s23, 0
      %s347 = scalar_select %p346, %s23, 0
      %p348 = scmp.lt.s32.totalorder %s24, 0
      %s349 = scalar_select %p348, %s24, 0
      %s350 = sadd.s32 %s349, %s347
      %s351 = smul.addr %s350, 4
      %s352 = scalar_lea.vmem %s3, %s351
      %p353 = scmp.lt.s32.totalorder %s21, 1
      %s354 = scalar_select %p353, %s21, 1
      %p355 = scmp.lt.s32.totalorder %s23, 0
      %s356 = scalar_select %p355, %s23, 0
      %p357 = scmp.lt.s32.totalorder %s22, 0
      %s358 = scalar_select %p357, %s22, 0
      %s359 = sadd.s32 %s358, %s356
      %s360 = sadd.s32 %s359, %s354
      %s361 = smul.addr %s360, 4
      %s362 = scalar_lea.vmem %s4, %s361
      %p364 = scmp.eq.s32.totalorder %s24, 0
      // Predicated region
      $region37: #{attention_forward.4} parent=35 // pred_check
        %p365 = pneg %p364
      $region38: #{attention_forward.4} parent=35 // pred_check_branch
        %367 = sbr.rel (%p365) target = $region40
      $region39: #{attention_forward.4} parent=35 // pred_region
        %vm368 = vcmask 7168
        %369 = vst.msk [vmem:[#allocation2] sm:$0xff] %vm368, -inf
        %370 = vst.msk [vmem:[#allocation2 + $0x8] sm:$0xff] %vm368, -inf
        %371 = vst.msk [vmem:[#allocation2 + $0x10] sm:$0xff] %vm368, -inf
        %372 = vst.msk [vmem:[#allocation2 + $0x18] sm:$0xff] %vm368, -inf
        %373 = vst.msk [vmem:[#allocation3] sm:$0xff] %vm368, 0.0
        %374 = vst.msk [vmem:[#allocation3 + $0x8] sm:$0xff] %vm368, 0.0
        %375 = vst.msk [vmem:[#allocation3 + $0x10] sm:$0xff] %vm368, 0.0
        %376 = vst.msk [vmem:[#allocation3 + $0x18] sm:$0xff] %vm368, 0.0
        %vm377 = vcmask 261120
        %378 = vst.msk [vmem:[#allocation4] sm:$0xff] %vm377, 0.0
        %379 = vst.msk [vmem:[#allocation4 + $0x8] sm:$0xff] %vm377, 0.0
        %380 = vst.msk [vmem:[#allocation4 + $0x10] sm:$0xff] %vm377, 0.0
        %381 = vst.msk [vmem:[#allocation4 + $0x18] sm:$0xff] %vm377, 0.0
      $region40: #{attention_forward.4} parent=35 // pred_fallthru
        _
      %v382 = vld [vmem:[%s325] sm:$0xf]
      %v383 = vld [vmem:[%s335] sm:$0xf]
      %v384 = vld [vmem:[%s345] sm:$0xf]
      %v385 = vld [vmem:[%s352] sm:$0xf]
      %v386 = vunpack.c.l.bf16 %v385
      %vm387 = vcmask 261120
      %v389 = vsel %vm387, %v382, 0
      %v392 = vsel %vm387, %v383, 0
      %394 = vmatpush.bf16.xpose.msra.mxu0 0
      %395 = vmatpush.bf16.xpose.msra.mxu0 0
      %396 = vmatpush.bf16.xpose.msra.mxu0 0
      %397 = vmatpush.bf16.xpose.msra.mxu0 0
      %398 = vmatpush.bf16.xpose.msra.mxu0 0
      %399 = vmatpush.bf16.xpose.msra.mxu0 0
      %400 = vmatpush.bf16.xpose.msra.mxu0 0
      %401 = vmatpush.bf16.xpose.msra.mxu0 %v392
      %402 = vmatmul.bf16.gmra.mxu0 %v389
      %v403 = vpop.f32.mrf.mxu0
      %v404 = vadd.f32 %v386, %v403
      %v405 = vpop.f32.mrf.mxu0
      %406 = vdwg.mxu0
      %v407 = vld [vmem:[#allocation2] sm:$0xff]
      %vm408 = vcmask 64512
      %v409 = vsel %vm408, %v404, -inf
      %410 = vmax.xlane.f32.xlu0 %v409
      %v411 = vpop.xlane.xlu0 %410
      %v412 = vmax.f32 %v407, %v411
      %v413 = vsub.f32 %v407, %v412
      %v414 = vmul.f32 %v413, 1.442695
      %v415 = vpow.pop %v414
      %417 = vset.pattern.permute.xlu0 0
      %418 = vperm.xlu0 %417, %v412
      %v419 = vpop.permute.xlu0 %418
      %v421 = vsub.f32 %v404, %v419
      %v422 = vmul.f32 %v421, 1.442695
      %v423 = vpow.pop %v422
      %v424 = vld [vmem:[#allocation3] sm:$0xff]
      %v425 = vmul.f32 %v415, %v424
      %v426 = vsel %vm408, %v423, 0.0
      %427 = vadd.xlane.f32.xlu0 %v426
      %v428 = vpop.xlane.xlu0 %427
      %v429 = vadd.f32 %v425, %v428
      %vm430 = vcmask 7168
      %431 = vst.msk [vmem:[#allocation3] sm:$0xff] %vm430, %v429
      %v432 = vld [vmem:[#allocation4] sm:$0xff]
      %434 = vset.pattern.permute.xlu0 0
      %435 = vperm.xlu0 %434, %v415
      %v436 = vpop.permute.xlu0 %435
      %v438 = vmul.f32 %v436, %v432
      %v439 = vpack.c.bf16 %v423, %v423
      %v441 = vsel %vm408, %v439, 0
      %vm443 = vcmask 1043456
      %v445 = vsel %vm443, %v384, 0
      %447 = vmatpush.bf16.msra.mxu0 0
      %448 = vmatpush.bf16.msra.mxu0 0
      %449 = vmatpush.bf16.msra.mxu0 0
      %450 = vmatpush.bf16.msra.mxu0 0
      %451 = vmatpush.bf16.msra.mxu0 0
      %452 = vmatpush.bf16.msra.mxu0 0
      %453 = vmatpush.bf16.msra.mxu0 0
      %454 = vmatpush.bf16.msra.mxu0 %v445
      %455 = vmatmul.bf16.gmra.mxu0 %v441
      %v456 = vpop.f32.mrf.mxu0
      %v457 = vadd.f32 0.0, %v456
      %v458 = vpop.f32.mrf.mxu0
      %459 = vdwg.mxu0
      %v460 = vadd.f32 %v438, %v457
      %461 = vst.msk [vmem:[#allocation4] sm:$0xff] %vm387, %v460
      %462 = vst.msk [vmem:[#allocation2] sm:$0xff] %vm430, %v412
      %v464 = vunpack.c.l.b16 %v382
      %v465 = vpack.c.b16 %v464, %v464
      %466 = vrot.lane.b32.xlu0 %v465, 96
      %v467 = vpop.permute.xlu0 %466
      %v469 = vunpack.c.l.b16 %v383
      %v470 = vpack.c.b16 %v469, %v469
      %471 = vrot.lane.b32.xlu0 %v470, 96
      %v472 = vpop.permute.xlu0 %471
      %v474 = vsel %vm387, %v467, 0
      %v477 = vsel %vm387, %v472, 0
      %479 = vmatpush.bf16.xpose.msra.mxu0 0
      %480 = vmatpush.bf16.xpose.msra.mxu0 0
      %481 = vmatpush.bf16.xpose.msra.mxu0 0
      %482 = vmatpush.bf16.xpose.msra.mxu0 0
      %483 = vmatpush.bf16.xpose.msra.mxu0 0
      %484 = vmatpush.bf16.xpose.msra.mxu0 0
      %485 = vmatpush.bf16.xpose.msra.mxu0 0
      %486 = vmatpush.bf16.xpose.msra.mxu0 %v477
      %487 = vmatmul.bf16.gmra.mxu0 %v474
      %v488 = vpop.f32.mrf.mxu0
      %v489 = vadd.f32 %v386, %v488
      %v490 = vpop.f32.mrf.mxu0
      %491 = vdwg.mxu0
      %s492 = scalar_lea.vmem [#allocation2], 8
      %v493 = vld [vmem:[%s492] sm:$0xff]
      %v494 = vsel %vm408, %v489, -inf
      %495 = vmax.xlane.f32.xlu0 %v494
      %v496 = vpop.xlane.xlu0 %495
      %v497 = vmax.f32 %v493, %v496
      %v498 = vsub.f32 %v493, %v497
      %v499 = vmul.f32 %v498, 1.442695
      %v500 = vpow.pop %v499
      %502 = vset.pattern.permute.xlu0 0
      %503 = vperm.xlu0 %502, %v497
      %v504 = vpop.permute.xlu0 %503
      %v506 = vsub.f32 %v489, %v504
      %v507 = vmul.f32 %v506, 1.442695
      %v508 = vpow.pop %v507
      %s509 = scalar_lea.vmem [#allocation3], 8
      %v510 = vld [vmem:[%s509] sm:$0xff]
      %v511 = vmul.f32 %v500, %v510
      %v512 = vsel %vm408, %v508, 0.0
      %513 = vadd.xlane.f32.xlu0 %v512
      %v514 = vpop.xlane.xlu0 %513
      %v515 = vadd.f32 %v511, %v514
      %516 = vst.msk [vmem:[%s509] sm:$0xff] %vm430, %v515
      %s517 = scalar_lea.vmem [#allocation4], 8
      %v518 = vld [vmem:[%s517] sm:$0xff]
      %520 = vset.pattern.permute.xlu0 0
      %521 = vperm.xlu0 %520, %v500
      %v522 = vpop.permute.xlu0 %521
      %v524 = vmul.f32 %v522, %v518
      %v525 = vpack.c.bf16 %v508, %v508
      %v527 = vunpack.c.l.b16 %v384
      %v528 = vpack.c.b16 %v527, %v527
      %529 = vrot.lane.b32.xlu0 %v528, 96
      %v530 = vpop.permute.xlu0 %529
      %v532 = vsel %vm408, %v525, 0
      %v535 = vsel %vm443, %v530, 0
      %537 = vmatpush.bf16.msra.mxu0 0
      %538 = vmatpush.bf16.msra.mxu0 0
      %539 = vmatpush.bf16.msra.mxu0 0
      %540 = vmatpush.bf16.msra.mxu0 0
      %541 = vmatpush.bf16.msra.mxu0 0
      %542 = vmatpush.bf16.msra.mxu0 0
      %543 = vmatpush.bf16.msra.mxu0 0
      %544 = vmatpush.bf16.msra.mxu0 %v535
      %545 = vmatmul.bf16.gmra.mxu0 %v532
      %v546 = vpop.f32.mrf.mxu0
      %v547 = vadd.f32 0.0, %v546
      %v548 = vpop.f32.mrf.mxu0
      %549 = vdwg.mxu0
      %v550 = vadd.f32 %v524, %v547
      %551 = vst.msk [vmem:[%s517] sm:$0xff] %vm387, %v550
      %552 = vst.msk [vmem:[%s492] sm:$0xff] %vm430, %v497
      %553 = vrot.lane.b32.xlu0 %v465, 64
      %v554 = vpop.permute.xlu0 %553
      %555 = vrot.lane.b32.xlu0 %v470, 64
      %v556 = vpop.permute.xlu0 %555
      %v558 = vsel %vm387, %v554, 0
      %v561 = vsel %vm387, %v556, 0
      %563 = vmatpush.bf16.xpose.msra.mxu0 0
      %564 = vmatpush.bf16.xpose.msra.mxu0 0
      %565 = vmatpush.bf16.xpose.msra.mxu0 0
      %566 = vmatpush.bf16.xpose.msra.mxu0 0
      %567 = vmatpush.bf16.xpose.msra.mxu0 0
      %568 = vmatpush.bf16.xpose.msra.mxu0 0
      %569 = vmatpush.bf16.xpose.msra.mxu0 0
      %570 = vmatpush.bf16.xpose.msra.mxu0 %v561
      %571 = vmatmul.bf16.gmra.mxu0 %v558
      %v572 = vpop.f32.mrf.mxu0
      %v573 = vadd.f32 %v386, %v572
      %v574 = vpop.f32.mrf.mxu0
      %575 = vdwg.mxu0
      %s576 = scalar_lea.vmem [#allocation2], 16
      %v577 = vld [vmem:[%s576] sm:$0xff]
      %v578 = vsel %vm408, %v573, -inf
      %579 = vmax.xlane.f32.xlu0 %v578
      %v580 = vpop.xlane.xlu0 %579
      %v581 = vmax.f32 %v577, %v580
      %v582 = vsub.f32 %v577, %v581
      %v583 = vmul.f32 %v582, 1.442695
      %v584 = vpow.pop %v583
      %586 = vset.pattern.permute.xlu0 0
      %587 = vperm.xlu0 %586, %v581
      %v588 = vpop.permute.xlu0 %587
      %v590 = vsub.f32 %v573, %v588
      %v591 = vmul.f32 %v590, 1.442695
      %v592 = vpow.pop %v591
      %s593 = scalar_lea.vmem [#allocation3], 16
      %v594 = vld [vmem:[%s593] sm:$0xff]
      %v595 = vmul.f32 %v584, %v594
      %v596 = vsel %vm408, %v592, 0.0
      %597 = vadd.xlane.f32.xlu0 %v596
      %v598 = vpop.xlane.xlu0 %597
      %v599 = vadd.f32 %v595, %v598
      %600 = vst.msk [vmem:[%s593] sm:$0xff] %vm430, %v599
      %s601 = scalar_lea.vmem [#allocation4], 16
      %v602 = vld [vmem:[%s601] sm:$0xff]
      %604 = vset.pattern.permute.xlu0 0
      %605 = vperm.xlu0 %604, %v584
      %v606 = vpop.permute.xlu0 %605
      %v608 = vmul.f32 %v606, %v602
      %v609 = vpack.c.bf16 %v592, %v592
      %610 = vrot.lane.b32.xlu0 %v528, 64
      %v611 = vpop.permute.xlu0 %610
      %v613 = vsel %vm408, %v609, 0
      %v616 = vsel %vm443, %v611, 0
      %618 = vmatpush.bf16.msra.mxu0 0
      %619 = vmatpush.bf16.msra.mxu0 0
      %620 = vmatpush.bf16.msra.mxu0 0
      %621 = vmatpush.bf16.msra.mxu0 0
      %622 = vmatpush.bf16.msra.mxu0 0
      %623 = vmatpush.bf16.msra.mxu0 0
      %624 = vmatpush.bf16.msra.mxu0 0
      %625 = vmatpush.bf16.msra.mxu0 %v616
      %626 = vmatmul.bf16.gmra.mxu0 %v613
      %v627 = vpop.f32.mrf.mxu0
      %v628 = vadd.f32 0.0, %v627
      %v629 = vpop.f32.mrf.mxu0
      %630 = vdwg.mxu0
      %v631 = vadd.f32 %v608, %v628
      %632 = vst.msk [vmem:[%s601] sm:$0xff] %vm387, %v631
      %633 = vst.msk [vmem:[%s576] sm:$0xff] %vm430, %v581
      %634 = vrot.lane.b32.xlu0 %v465, 32
      %v635 = vpop.permute.xlu0 %634
      %636 = vrot.lane.b32.xlu0 %v470, 32
      %v637 = vpop.permute.xlu0 %636
      %v639 = vsel %vm387, %v635, 0
      %v642 = vsel %vm387, %v637, 0
      %644 = vmatpush.bf16.xpose.msra.mxu0 0
      %645 = vmatpush.bf16.xpose.msra.mxu0 0
      %646 = vmatpush.bf16.xpose.msra.mxu0 0
      %647 = vmatpush.bf16.xpose.msra.mxu0 0
      %648 = vmatpush.bf16.xpose.msra.mxu0 0
      %649 = vmatpush.bf16.xpose.msra.mxu0 0
      %650 = vmatpush.bf16.xpose.msra.mxu0 0
      %651 = vmatpush.bf16.xpose.msra.mxu0 %v642
      %652 = vmatmul.bf16.gmra.mxu0 %v639
      %v653 = vpop.f32.mrf.mxu0
      %v654 = vadd.f32 %v386, %v653
      %v655 = vpop.f32.mrf.mxu0
      %656 = vdwg.mxu0
      %s657 = scalar_lea.vmem [#allocation2], 24
      %v658 = vld [vmem:[%s657] sm:$0xff]
      %v659 = vsel %vm408, %v654, -inf
      %660 = vmax.xlane.f32.xlu0 %v659
      %v661 = vpop.xlane.xlu0 %660
      %v662 = vmax.f32 %v658, %v661
      %v663 = vsub.f32 %v658, %v662
      %v664 = vmul.f32 %v663, 1.442695
      %v665 = vpow.pop %v664
      %667 = vset.pattern.permute.xlu0 0
      %668 = vperm.xlu0 %667, %v662
      %v669 = vpop.permute.xlu0 %668
      %v671 = vsub.f32 %v654, %v669
      %v672 = vmul.f32 %v671, 1.442695
      %v673 = vpow.pop %v672
      %s674 = scalar_lea.vmem [#allocation3], 24
      %v675 = vld [vmem:[%s674] sm:$0xff]
      %v676 = vmul.f32 %v665, %v675
      %v677 = vsel %vm408, %v673, 0.0
      %678 = vadd.xlane.f32.xlu0 %v677
      %v679 = vpop.xlane.xlu0 %678
      %v680 = vadd.f32 %v676, %v679
      %681 = vst.msk [vmem:[%s674] sm:$0xff] %vm430, %v680
      %s682 = scalar_lea.vmem [#allocation4], 24
      %v683 = vld [vmem:[%s682] sm:$0xff]
      %685 = vset.pattern.permute.xlu0 0
      %686 = vperm.xlu0 %685, %v665
      %v687 = vpop.permute.xlu0 %686
      %v689 = vmul.f32 %v687, %v683
      %v690 = vpack.c.bf16 %v673, %v673
      %691 = vrot.lane.b32.xlu0 %v528, 32
      %v692 = vpop.permute.xlu0 %691
      %v694 = vsel %vm408, %v690, 0
      %v697 = vsel %vm443, %v692, 0
      %699 = vmatpush.bf16.msra.mxu0 0
      %700 = vmatpush.bf16.msra.mxu0 0
      %701 = vmatpush.bf16.msra.mxu0 0
      %702 = vmatpush.bf16.msra.mxu0 0
      %703 = vmatpush.bf16.msra.mxu0 0
      %704 = vmatpush.bf16.msra.mxu0 0
      %705 = vmatpush.bf16.msra.mxu0 0
      %706 = vmatpush.bf16.msra.mxu0 %v697
      %707 = vmatmul.bf16.gmra.mxu0 %v694
      %v708 = vpop.f32.mrf.mxu0
      %v709 = vadd.f32 0.0, %v708
      %v710 = vpop.f32.mrf.mxu0
      %711 = vdwg.mxu0
      %v712 = vadd.f32 %v689, %v709
      %713 = vst.msk [vmem:[%s682] sm:$0xff] %vm387, %v712
      %714 = vst.msk [vmem:[%s657] sm:$0xff] %vm430, %v662
      // Predicated region
      $region41: #{attention_forward.4} parent=35 // pred_check
        %p715 = pneg %p364
      $region42: #{attention_forward.4} parent=35 // pred_check_branch
        %717 = sbr.rel (%p715) target = $region44
      $region43: #{attention_forward.4} parent=35 // pred_region
        %v718 = vld [vmem:[#allocation4] sm:$0xff]
        %v719 = vld [vmem:[#allocation3] sm:$0xff]
        %v720 = vrcp.pop %v719
        %722 = vset.pattern.permute.xlu0 0
        %723 = vperm.xlu0 %722, %v720
        %v724 = vpop.permute.xlu0 %723
        %v726 = vmul.f32 %v718, %v724
        %v727 = vld [vmem:[%s517] sm:$0xff]
        %v728 = vld [vmem:[%s509] sm:$0xff]
        %v729 = vrcp.pop %v728
        %731 = vset.pattern.permute.xlu0 0
        %732 = vperm.xlu0 %731, %v729
        %v733 = vpop.permute.xlu0 %732
        %v735 = vmul.f32 %v727, %v733
        %v736 = vld [vmem:[%s601] sm:$0xff]
        %v737 = vld [vmem:[%s593] sm:$0xff]
        %v738 = vrcp.pop %v737
        %740 = vset.pattern.permute.xlu0 0
        %741 = vperm.xlu0 %740, %v738
        %v742 = vpop.permute.xlu0 %741
        %v744 = vmul.f32 %v736, %v742
        %v745 = vld [vmem:[%s682] sm:$0xff]
        %v746 = vld [vmem:[%s674] sm:$0xff]
        %v747 = vrcp.pop %v746
        %749 = vset.pattern.permute.xlu0 0
        %750 = vperm.xlu0 %749, %v747
        %v751 = vpop.permute.xlu0 %750
        %v753 = vmul.f32 %v745, %v751
        %755 = vrot.lane.b32.xlu0 %v735, 32
        %v756 = vpop.permute.xlu0 %755
        %759 = vrot.lane.b32.xlu0 %v744, 64
        %v760 = vpop.permute.xlu0 %759
        %763 = vrot.lane.b32.xlu0 %v753, 96
        %v764 = vpop.permute.xlu0 %763
        %v766 = vsel %vm387, %v726, %v756
        %vm767 = vcmask 523264
        %v768 = vsel %vm767, %v766, %v760
        %vm769 = vcmask 785408
        %v770 = vsel %vm769, %v768, %v764
        %v771 = vpack.c.bf16 %v770, %v770
        %772 = vst [vmem:[%s362] sm:$0xf] %v771
      $region44: #{attention_forward.4} parent=35 // pred_fallthru
        _
      %p773 = scmp.lt.s32.totalorder %s21, 1
      %s774 = scalar_select %p773, %s21, 1
      %p775 = scmp.lt.s32.totalorder %s23, 0
      %s776 = scalar_select %p775, %s23, 0
      %p777 = scmp.lt.s32.totalorder %s22, 0
      %s778 = scalar_select %p777, %s22, 0
      %s779 = sadd.s32 %s778, %s776
      %s780 = sadd.s32 %s779, %s774
      %s781 = smul.addr %s780, 4
      %s782 = scalar_lea.vmem %s4, %s781
      // Predicated region
      $region45: #{attention_forward.4} parent=35 // pred_check
        %p783 = pneg %p181
      $region46: #{attention_forward.4} parent=35 // pred_check_branch
        %785 = sbr.rel (%p783) target = $region48
      $region47: #{attention_forward.4} parent=35 // pred_region
        _
      $region48: #{attention_forward.4} parent=35 // pred_fallthru
        _
    $region36: #{attention_forward.4} parent=5 // pred_fallthru
      _
    %p786 = scmp.le.s32.totalorder 2, %s10
    // Predicated region
    $region49: #{attention_forward.4} parent=5 // pred_check
      %p787 = pneg %p786
    $region50: #{attention_forward.4} parent=5 // pred_check_branch
      %789 = sbr.rel (%p787) target = $region52
    $region51: #{attention_forward.4} parent=5 // pred_region
      %s790 = ssub.s32 %s10, 2
      // Predicated region
      $region53: #{attention_forward.4} parent=51 // pred_check
        %p791 = pneg %p187
      $region54: #{attention_forward.4} parent=51 // pred_check_branch
        %793 = sbr.rel (%p791) target = $region56
      $region55: #{attention_forward.4} parent=51 // pred_region
        %p794 = scmp.lt.s32.totalorder %s25, 1
        %s795 = scalar_select %p794, %s25, 1
        %p796 = scmp.lt.s32.totalorder %s27, 0
        %s797 = scalar_select %p796, %s27, 0
        %p798 = scmp.lt.s32.totalorder %s26, 0
        %s799 = scalar_select %p798, %s26, 0
        %s800 = sadd.s32 %s799, %s797
        %s801 = sadd.s32 %s800, %s795
        %s802 = smul.addr %s801, 4
        %s803 = scalar_lea.vmem %s4, %s802
      $region56: #{attention_forward.4} parent=51 // pred_fallthru
        _
    $region52: #{attention_forward.4} parent=5 // pred_fallthru
      _
  $region6: #{attention_forward.4} parent=0 // loop_footer
    %s14 = sadd.s32 1, %s10
  $region7: #{attention_forward.4} parent=0 // loop_footer_branch
    %9 = sbr.rel target = $region3
  $region8: #{attention_forward.4} parent=0 // loop_exit
    _

</llo_original>
